<compile_context>
chip_gen: v7x
topology: tpu7x:2x2x1
jax: 0.10.0
libtpu: 0.0.40
codegen_flags: <defaults>
</compile_context>

<pallas_src>
import jax
import jax.numpy as jnp
from jax.experimental import pallas as pl
from jax.experimental.pallas import tpu as pltpu


def _round_up(x, m):
    return ((x + m - 1) // m) * m


def value_net_kernel(x_ref,
                     w1_ref, b1_ref,
                     w2_ref, b2_ref,
                     w3_ref, b3_ref,
                     w4_ref, b4_ref,
                     out_ref):
    """One (D, TB) batch tile -> (1, TB) values. Batch is on the lane axis.

    Weights are in PyTorch layout (out, in); biases are (out, 1); the last
    layer weight is (H, 1) and its bias (1, 1).
    """
    f32 = jnp.float32
    wdt = w1_ref.dtype                                   # matmul compute dtype
    prec = jax.lax.Precision.HIGHEST if wdt == jnp.float32 else None

    x = x_ref[...].astype(wdt)                           # (D, TB)

    h = jnp.tanh(
        jnp.dot(w1_ref[...], x, preferred_element_type=f32, precision=prec)
        + b1_ref[...])                                   # (H, TB) f32
    h = jnp.tanh(
        jnp.dot(w2_ref[...], h.astype(wdt), preferred_element_type=f32,
                precision=prec) + b2_ref[...])
    h = jnp.tanh(
        jnp.dot(w3_ref[...], h.astype(wdt), preferred_element_type=f32,
                precision=prec) + b3_ref[...])

    # Final H -> 1 layer: VPU multiply + sublane reduction (keeps the MXU free
    # and the (1, TB) result lane-dense).
    w4 = w4_ref[...].astype(f32)                         # (H, 1)
    out = jnp.sum(h * w4, axis=0, keepdims=True) + b4_ref[...]   # (1, TB)
    out_ref[...] = out.astype(out_ref.dtype)


def value_net_forward(x, params, *, block_b=512, compute_dtype=jnp.float32):
    """x: (B, dStates) float32; params: PyTorch-layout w{i}: (out, in), b{i}: (out,)."""
    f32 = jnp.float32
    B, D = x.shape
    H = params["w1"].shape[0]

    # Batch tile: multiple of 128 lanes; don't over-pad tiny batches.
    tb = _round_up(min(block_b, _round_up(B, 128)), 128)
    b_pad = _round_up(B, tb)
    grid = (b_pad // tb,)

    # Batch onto the lane axis: (D, B_pad).
    x_t = jnp.pad(x.astype(f32), ((0, b_pad - B), (0, 0))).T

    wdt = compute_dtype
    w1 = params["w1"].astype(wdt); b1 = params["b1"].reshape(H, 1).astype(f32)
    w2 = params["w2"].astype(wdt); b2 = params["b2"].reshape(H, 1).astype(f32)
    w3 = params["w3"].astype(wdt); b3 = params["b3"].reshape(H, 1).astype(f32)
    w4 = params["w4"].reshape(1, H).T.astype(wdt)        # (H, 1)
    b4 = params["b4"].reshape(1, 1).astype(f32)

    def resident(shape):
        # Full-array block, same block every grid step -> stays in VMEM.
        return pl.BlockSpec(shape, lambda i: (0, 0))

    weight_bytes = sum(int(a.size) * a.dtype.itemsize
                       for a in (w1, b1, w2, b2, w3, b3, w4, b4))
    cost = pl.CostEstimate(
        flops=2 * b_pad * (D * H + 2 * H * H + H),
        transcendentals=3 * b_pad * H,
        bytes_accessed=4 * (b_pad * D + b_pad) + weight_bytes,
    )

    out_t = pl.pallas_call(
        value_net_kernel,
        out_shape=jax.ShapeDtypeStruct((1, b_pad), f32),
        grid=grid,
        in_specs=[
            pl.BlockSpec((D, tb), lambda i: (0, i)),     # x tile (pipelined)
            resident((H, D)), resident((H, 1)),          # layer 1
            resident((H, H)), resident((H, 1)),          # layer 2
            resident((H, H)), resident((H, 1)),          # layer 3
            resident((H, 1)), resident((1, 1)),          # layer 4
        ],
        out_specs=pl.BlockSpec((1, tb), lambda i: (0, i)),
        compiler_params=pltpu.CompilerParams(
            dimension_semantics=("parallel",)),
        cost_estimate=cost,
    )(x_t, w1, b1, w2, b2, w3, b3, w4, b4)

    return out_t[0, :B][:, None]                         # back to (B, 1)


def init_value_net_params(key, d_states, n_hidden):
    """PyTorch nn.Linear default init: U(-1/sqrt(fan_in), +1/sqrt(fan_in))."""
    dims = [(n_hidden, d_states), (n_hidden, n_hidden),
            (n_hidden, n_hidden), (1, n_hidden)]
    params = {}
    for i, (fan_out, fan_in) in enumerate(dims, start=1):
        key, kw, kb = jax.random.split(key, 3)
        bound = 1.0 / (fan_in ** 0.5)
        params[f"w{i}"] = jax.random.uniform(
            kw, (fan_out, fan_in), jnp.float32, minval=-bound, maxval=bound)
        params[f"b{i}"] = jax.random.uniform(
            kb, (fan_out,), jnp.float32, minval=-bound, maxval=bound)
    return params


def value_net_ref(x, params, compute_dtype=jnp.float32):
    """Pure-JAX reference mirroring the kernel's dtype handling."""
    f32 = jnp.float32
    dt = compute_dtype
    prec = jax.lax.Precision.HIGHEST if jnp.dtype(dt) == jnp.dtype(f32) else None

    def layer(h, w, b):
        y = jnp.dot(h.astype(dt), w.astype(dt).T,
                    preferred_element_type=f32, precision=prec)
        return jnp.tanh(y + b.astype(f32))

    h = layer(x, params["w1"], params["b1"])
    h = layer(h, params["w2"], params["b2"])
    h = layer(h, params["w3"], params["b3"])
    w4 = params["w4"].astype(dt).astype(f32)             # quantize like the kernel
    return jnp.dot(h, w4.T, preferred_element_type=f32,
                   precision=jax.lax.Precision.HIGHEST) + params["b4"].astype(f32)


if __name__ == "__main__":
    B, D_STATES, N_HIDDEN = 8, 16, 32

    key = jax.random.PRNGKey(0)
    key, kx = jax.random.split(key)
    x = jax.random.normal(kx, (B, D_STATES), jnp.float32)
    params = init_value_net_params(key, D_STATES, N_HIDDEN)

    # f32 path (parity with the PyTorch float32 forward).
    out = jax.block_until_ready(value_net_forward(x, params))
    ref = value_net_ref(x, params)
    assert out.shape == (B, 1)
    assert jnp.allclose(out, ref, atol=1e-5, rtol=1e-5)

    # bf16 matmul path (native MXU dtype on v6e/v7x), checked against a
    # reference that applies the same weight/activation quantization.
    out_bf16 = jax.block_until_ready(
        value_net_forward(x, params, compute_dtype=jnp.bfloat16))
    ref_bf16 = value_net_ref(x, params, compute_dtype=jnp.bfloat16)
    assert jnp.allclose(out_bf16, ref_bf16, atol=1e-3, rtol=1e-3)

    # Larger, non-multiple batch exercises the grid / pipelining / padding path.
    x_big = jax.random.normal(jax.random.PRNGKey(1), (1000, D_STATES), jnp.float32)
    out_big = jax.block_until_ready(value_net_forward(x_big, params, block_b=256))
    ref_big = value_net_ref(x_big, params)
    assert out_big.shape == (1000, 1)
    assert jnp.allclose(out_big, ref_big, atol=1e-5, rtol=1e-5)

    print("KERNEL_OK")
</pallas_src>

<mosaic_0001>
module attributes {stable_mosaic.version = 11 : i64} {
  func.func @value_net_kernel(%arg0: i32, %arg1: memref<16x128xf32, #tpu.memory_space<vmem>>, %arg2: memref<32x16xf32, #tpu.memory_space<vmem>>, %arg3: memref<32x1xf32, #tpu.memory_space<vmem>>, %arg4: memref<32x32xf32, #tpu.memory_space<vmem>>, %arg5: memref<32x1xf32, #tpu.memory_space<vmem>>, %arg6: memref<32x32xf32, #tpu.memory_space<vmem>>, %arg7: memref<32x1xf32, #tpu.memory_space<vmem>>, %arg8: memref<32x1xf32, #tpu.memory_space<vmem>>, %arg9: memref<1x1xf32, #tpu.memory_space<vmem>>, %arg10: memref<1x128xf32, #tpu.memory_space<vmem>>) attributes {dimension_semantics = [#tpu.dimension_semantics<parallel>], iteration_bounds = array<i64: 1>, scalar_prefetch = 0 : i64, scratch_operands = 0 : i64, tpu.core_type = #tpu.core_type<tc>, window_params = [{transform_indices = @transform_0, window_bounds = array<i64: 16, 128>}, {pipeline_mode = #tpu.pipeline_mode<synchronous>, transform_indices = @transform_1, window_bounds = array<i64: 32, 16>}, {pipeline_mode = #tpu.pipeline_mode<synchronous>, transform_indices = @transform_2, window_bounds = array<i64: 32, 1>}, {pipeline_mode = #tpu.pipeline_mode<synchronous>, transform_indices = @transform_3, window_bounds = array<i64: 32, 32>}, {pipeline_mode = #tpu.pipeline_mode<synchronous>, transform_indices = @transform_4, window_bounds = array<i64: 32, 1>}, {pipeline_mode = #tpu.pipeline_mode<synchronous>, transform_indices = @transform_5, window_bounds = array<i64: 32, 32>}, {pipeline_mode = #tpu.pipeline_mode<synchronous>, transform_indices = @transform_6, window_bounds = array<i64: 32, 1>}, {pipeline_mode = #tpu.pipeline_mode<synchronous>, transform_indices = @transform_7, window_bounds = array<i64: 32, 1>}, {pipeline_mode = #tpu.pipeline_mode<synchronous>, transform_indices = @transform_8, window_bounds = array<i64: 1, 1>}, {transform_indices = @transform_9, window_bounds = array<i64: 1, 128>}]} {
    %c0 = arith.constant 0 : index
    %c0_0 = arith.constant 0 : index
    %0 = vector.load %arg1[%c0, %c0_0] : memref<16x128xf32, #tpu.memory_space<vmem>>, vector<16x128xf32>
    %c0_1 = arith.constant 0 : index
    %c0_2 = arith.constant 0 : index
    %1 = vector.load %arg2[%c0_1, %c0_2] : memref<32x16xf32, #tpu.memory_space<vmem>>, vector<32x16xf32>
    %cst = arith.constant dense<0.000000e+00> : vector<32x128xf32>
    %2 = tpu.matmul %1, %0, %cst {dimension_numbers = #tpu.dot_dimension_numbers<[1], [0], [0], [1], [0, 0, 1, 1], [], []>, precision = #tpu.contract_precision<fp32>} : vector<32x16xf32>, vector<16x128xf32>, vector<32x128xf32> -> vector<32x128xf32>
    %c0_3 = arith.constant 0 : index
    %c0_4 = arith.constant 0 : index
    %3 = vector.load %arg3[%c0_3, %c0_4] : memref<32x1xf32, #tpu.memory_space<vmem>>, vector<32x1xf32>
    %4 = vector.broadcast %3 : vector<32x1xf32> to vector<32x128xf32>
    %5 = arith.addf %2, %4 : vector<32x128xf32>
    %6 = math.tanh %5 : vector<32x128xf32>
    %c0_5 = arith.constant 0 : index
    %c0_6 = arith.constant 0 : index
    %7 = vector.load %arg4[%c0_5, %c0_6] : memref<32x32xf32, #tpu.memory_space<vmem>>, vector<32x32xf32>
    %cst_7 = arith.constant dense<0.000000e+00> : vector<32x128xf32>
    %8 = tpu.matmul %7, %6, %cst_7 {dimension_numbers = #tpu.dot_dimension_numbers<[1], [0], [0], [1], [0, 0, 1, 1], [], []>, precision = #tpu.contract_precision<fp32>} : vector<32x32xf32>, vector<32x128xf32>, vector<32x128xf32> -> vector<32x128xf32>
    %c0_8 = arith.constant 0 : index
    %c0_9 = arith.constant 0 : index
    %9 = vector.load %arg5[%c0_8, %c0_9] : memref<32x1xf32, #tpu.memory_space<vmem>>, vector<32x1xf32>
    %10 = vector.broadcast %9 : vector<32x1xf32> to vector<32x128xf32>
    %11 = arith.addf %8, %10 : vector<32x128xf32>
    %12 = math.tanh %11 : vector<32x128xf32>
    %c0_10 = arith.constant 0 : index
    %c0_11 = arith.constant 0 : index
    %13 = vector.load %arg6[%c0_10, %c0_11] : memref<32x32xf32, #tpu.memory_space<vmem>>, vector<32x32xf32>
    %cst_12 = arith.constant dense<0.000000e+00> : vector<32x128xf32>
    %14 = tpu.matmul %13, %12, %cst_12 {dimension_numbers = #tpu.dot_dimension_numbers<[1], [0], [0], [1], [0, 0, 1, 1], [], []>, precision = #tpu.contract_precision<fp32>} : vector<32x32xf32>, vector<32x128xf32>, vector<32x128xf32> -> vector<32x128xf32>
    %c0_13 = arith.constant 0 : index
    %c0_14 = arith.constant 0 : index
    %15 = vector.load %arg7[%c0_13, %c0_14] : memref<32x1xf32, #tpu.memory_space<vmem>>, vector<32x1xf32>
    %16 = vector.broadcast %15 : vector<32x1xf32> to vector<32x128xf32>
    %17 = arith.addf %14, %16 : vector<32x128xf32>
    %18 = math.tanh %17 : vector<32x128xf32>
    %c0_15 = arith.constant 0 : index
    %c0_16 = arith.constant 0 : index
    %19 = vector.load %arg8[%c0_15, %c0_16] : memref<32x1xf32, #tpu.memory_space<vmem>>, vector<32x1xf32>
    %20 = vector.broadcast %19 : vector<32x1xf32> to vector<32x128xf32>
    %21 = arith.mulf %18, %20 : vector<32x128xf32>
    %cst_17 = arith.constant dense<0.000000e+00> : vector<128xf32>
    %22 = vector.multi_reduction <add>, %21, %cst_17 [0] : vector<32x128xf32> to vector<128xf32>
    %23 = vector.shape_cast %22 : vector<128xf32> to vector<1x128xf32>
    %c0_18 = arith.constant 0 : index
    %c0_19 = arith.constant 0 : index
    %24 = vector.load %arg9[%c0_18, %c0_19] : memref<1x1xf32, #tpu.memory_space<vmem>>, vector<1x1xf32>
    %25 = vector.broadcast %24 : vector<1x1xf32> to vector<1x128xf32>
    %26 = arith.addf %23, %25 : vector<1x128xf32>
    %c0_20 = arith.constant 0 : index
    %c0_21 = arith.constant 0 : index
    %27 = vector.load %arg10[%c0_20, %c0_21] : memref<1x128xf32, #tpu.memory_space<vmem>>, vector<1x128xf32>
    tpu.vector_store %arg10[%c0_20, %c0_21], %26 {strides = array<i32>} : memref<1x128xf32, #tpu.memory_space<vmem>>, vector<1x128xf32>,
    return
  }
  func.func @transform_0(%arg0: i32) -> (i32, i32) {
    %c0_i32 = arith.constant 0 : i32
    %c0_i32_0 = arith.constant 0 : i32
    return %c0_i32, %arg0 : i32, i32
  }
  func.func @transform_1(%arg0: i32) -> (i32, i32) {
    %c0_i32 = arith.constant 0 : i32
    %c0_i32_0 = arith.constant 0 : i32
    %c0_i32_1 = arith.constant 0 : i32
    return %c0_i32, %c0_i32_0 : i32, i32
  }
  func.func @transform_2(%arg0: i32) -> (i32, i32) {
    %c0_i32 = arith.constant 0 : i32
    %c0_i32_0 = arith.constant 0 : i32
    %c0_i32_1 = arith.constant 0 : i32
    return %c0_i32, %c0_i32_0 : i32, i32
  }
  func.func @transform_3(%arg0: i32) -> (i32, i32) {
    %c0_i32 = arith.constant 0 : i32
    %c0_i32_0 = arith.constant 0 : i32
    %c0_i32_1 = arith.constant 0 : i32
    return %c0_i32, %c0_i32_0 : i32, i32
  }
  func.func @transform_4(%arg0: i32) -> (i32, i32) {
    %c0_i32 = arith.constant 0 : i32
    %c0_i32_0 = arith.constant 0 : i32
    %c0_i32_1 = arith.constant 0 : i32
    return %c0_i32, %c0_i32_0 : i32, i32
  }
  func.func @transform_5(%arg0: i32) -> (i32, i32) {
    %c0_i32 = arith.constant 0 : i32
    %c0_i32_0 = arith.constant 0 : i32
    %c0_i32_1 = arith.constant 0 : i32
    return %c0_i32, %c0_i32_0 : i32, i32
  }
  func.func @transform_6(%arg0: i32) -> (i32, i32) {
    %c0_i32 = arith.constant 0 : i32
    %c0_i32_0 = arith.constant 0 : i32
    %c0_i32_1 = arith.constant 0 : i32
    return %c0_i32, %c0_i32_0 : i32, i32
  }
  func.func @transform_7(%arg0: i32) -> (i32, i32) {
    %c0_i32 = arith.constant 0 : i32
    %c0_i32_0 = arith.constant 0 : i32
    %c0_i32_1 = arith.constant 0 : i32
    return %c0_i32, %c0_i32_0 : i32, i32
  }
  func.func @transform_8(%arg0: i32) -> (i32, i32) {
    %c0_i32 = arith.constant 0 : i32
    %c0_i32_0 = arith.constant 0 : i32
    %c0_i32_1 = arith.constant 0 : i32
    return %c0_i32, %c0_i32_0 : i32, i32
  }
  func.func @transform_9(%arg0: i32) -> (i32, i32) {
    %c0_i32 = arith.constant 0 : i32
    %c0_i32_0 = arith.constant 0 : i32
    return %c0_i32, %arg0 : i32, i32
  }
}

</mosaic_0001>

<llo_original>
// kernel: tpu_custom_call.1
$region0: #{tpu_custom_call.1}
  #allocation0 [shape = 'u32[]', space=smem, size = 0x4, offset = 0x4, fixed_abs, tag = 'smem constant byte address 0x4 - core index']
  #allocation1 [shape = 'u32[144,128]{1,0:T(1,128)}', space=vmem, size = 0x12000, scoped, tag = 'internal scratch']
  #allocation2 [shape = 'f32[1,1]{1,0:T(1,128)S(1)}', space=vmem, size = 0x200, scoped, tag = 'scoped memory for tpu_custom_call.1']
  %s0 = inlined_call_operand.vmem [shape: f32[16,128], index: 0, kind: input, shape index: {}]
  %s1 = inlined_call_operand.vmem [shape: f32[32,16], index: 1, kind: input, shape index: {}]
  %s2 = inlined_call_operand.vmem [shape: f32[32,1], index: 2, kind: input, shape index: {}]
  %s3 = inlined_call_operand.vmem [shape: f32[32,32], index: 3, kind: input, shape index: {}]
  %s4 = inlined_call_operand.vmem [shape: f32[32,1], index: 4, kind: input, shape index: {}]
  %s5 = inlined_call_operand.vmem [shape: f32[32,32], index: 5, kind: input, shape index: {}]
  %s6 = inlined_call_operand.vmem [shape: f32[32,1], index: 6, kind: input, shape index: {}]
  %s7 = inlined_call_operand.vmem [shape: f32[32,1], index: 7, kind: input, shape index: {}]
  %s8 = inlined_call_operand.<no memory space> [shape: f32[1,1], index: 8, kind: input, shape index: {}]
  %s9 = inlined_call_operand.hbm [shape: f32[1,128], index: 9, kind: output, shape index: {}]
  %s10 = sld [smem:[#allocation0]]
  $region46: #{tpu_custom_call.1} parent=0
    _
  %s12 = ssub.s32 1, %s10
  %s13 = scalar_select 0, %s12, %s10
  %v14 = vstv %s8
  %15 = vst [vmem:[#allocation2] sm:$0x1] %v14
  $region1: #{tpu_custom_call.1} parent=0
    #allocation3 [shape = 'u8[512]{0}', space=vmem, size = 0x400, scoped, tag = 'output window, operand 0, single buffered']
    #allocation4 [shape = 's32[1]{0}', space=sflag, size = 0x4, scoped, tag = 'scoped memory for tpu_custom_call.1']
    %16 = vsyncpa [#allocation4], 0
    // Predicated region
    $region2: #{tpu_custom_call.1} parent=1 // pred_check
      _
    $region3: #{tpu_custom_call.1} parent=1 // pred_check_branch
      %18 = sbr.rel (0) target = $region5
    $region4: #{tpu_custom_call.1} parent=1 // pred_region
      _
    $region5: #{tpu_custom_call.1} parent=1 // pred_fallthru
      _
    // Predicated region
    $region6: #{tpu_custom_call.1} parent=1 // pred_check
      _
    $region7: #{tpu_custom_call.1} parent=1 // pred_check_branch
      %20 = sbr.rel (0) target = $region9
    $region8: #{tpu_custom_call.1} parent=1 // pred_region
      _
    $region9: #{tpu_custom_call.1} parent=1 // pred_fallthru
      _
    // Predicated region
    $region10: #{tpu_custom_call.1} parent=1 // pred_check
      _
    $region11: #{tpu_custom_call.1} parent=1 // pred_check_branch
      %22 = sbr.rel (0) target = $region13
    $region12: #{tpu_custom_call.1} parent=1 // pred_region
      _
    $region13: #{tpu_custom_call.1} parent=1 // pred_fallthru
      _
    // Predicated region
    $region14: #{tpu_custom_call.1} parent=1 // pred_check
      _
    $region15: #{tpu_custom_call.1} parent=1 // pred_check_branch
      %24 = sbr.rel (0) target = $region17
    $region16: #{tpu_custom_call.1} parent=1 // pred_region
      _
    $region17: #{tpu_custom_call.1} parent=1 // pred_fallthru
      _
    // Predicated region
    $region18: #{tpu_custom_call.1} parent=1 // pred_check
      _
    $region19: #{tpu_custom_call.1} parent=1 // pred_check_branch
      %26 = sbr.rel (0) target = $region21
    $region20: #{tpu_custom_call.1} parent=1 // pred_region
      _
    $region21: #{tpu_custom_call.1} parent=1 // pred_fallthru
      _
    // Predicated region
    $region22: #{tpu_custom_call.1} parent=1 // pred_check
      _
    $region23: #{tpu_custom_call.1} parent=1 // pred_check_branch
      %28 = sbr.rel (0) target = $region25
    $region24: #{tpu_custom_call.1} parent=1 // pred_region
      _
    $region25: #{tpu_custom_call.1} parent=1 // pred_fallthru
      _
    // Predicated region
    $region26: #{tpu_custom_call.1} parent=1 // pred_check
      _
    $region27: #{tpu_custom_call.1} parent=1 // pred_check_branch
      %30 = sbr.rel (0) target = $region29
    $region28: #{tpu_custom_call.1} parent=1 // pred_region
      _
    $region29: #{tpu_custom_call.1} parent=1 // pred_fallthru
      _
    // Predicated region
    $region30: #{tpu_custom_call.1} parent=1 // pred_check
      _
    $region31: #{tpu_custom_call.1} parent=1 // pred_check_branch
      %32 = sbr.rel (0) target = $region33
    $region32: #{tpu_custom_call.1} parent=1 // pred_region
      _
    $region33: #{tpu_custom_call.1} parent=1 // pred_fallthru
      _
    // Predicated region
    $region34: #{tpu_custom_call.1} parent=1 // pred_check
      _
    $region35: #{tpu_custom_call.1} parent=1 // pred_check_branch
      %34 = sbr.rel (0) target = $region37
    $region36: #{tpu_custom_call.1} parent=1 // pred_region
      _
    $region37: #{tpu_custom_call.1} parent=1 // pred_fallthru
      _
    %v35 = vld [vmem:[%s0] sm:$0xff]
    %v36 = vld [vmem:[%s0 + $0x8] sm:$0xff]
    %v37 = vld [vmem:[%s1] sm:$0xff]
    %v38 = vld [vmem:[%s1 + $0x8] sm:$0xff]
    %v39 = vld [vmem:[%s1 + $0x10] sm:$0xff]
    %v40 = vld [vmem:[%s1 + $0x18] sm:$0xff]
    %v41 = vld [vmem:[%s2] sm:$0xff]
    %v42 = vld [vmem:[%s2 + $0x8] sm:$0xff]
    %v43 = vld [vmem:[%s2 + $0x10] sm:$0xff]
    %v44 = vld [vmem:[%s2 + $0x18] sm:$0xff]
    %46 = vset.pattern.permute.xlu0 0
    %47 = vperm.xlu0 %46, %v41
    %v48 = vpop.permute.xlu0 %47
    %51 = vset.pattern.permute.xlu0 0
    %52 = vperm.xlu0 %51, %v42
    %v53 = vpop.permute.xlu0 %52
    %56 = vset.pattern.permute.xlu0 0
    %57 = vperm.xlu0 %56, %v43
    %v58 = vpop.permute.xlu0 %57
    %61 = vset.pattern.permute.xlu0 0
    %62 = vperm.xlu0 %61, %v44
    %v63 = vpop.permute.xlu0 %62
    %vm65 = vcmask 130048
    %v67 = vsel %vm65, %v37, 0
    %v70 = vsel %vm65, %v38, 0
    %v73 = vsel %vm65, %v39, 0
    %v76 = vsel %vm65, %v40, 0
    %78 = vmatprep.subr.mxu0 0.0
    %v79 = vand.u32 %v35, 4294901760
    %80 = vmatpush1.msra.mxu0 %v79
    %81 = vmatprep.subr.mxu0 0.0
    %v82 = vand.u32 %v36, 4294901760
    %83 = vmatpush1.msra.mxu0 %v82
    %84 = vmatprep.subr.mxu0 0.0
    %85 = vmatpush1.msra.mxu0 0.0
    %86 = vmatprep.subr.mxu0 0.0
    %87 = vmatpush1.msra.mxu0 0.0
    %88 = vmatprep.subr.mxu0 0.0
    %89 = vmatpush1.msra.mxu0 0.0
    %90 = vmatprep.subr.mxu0 0.0
    %91 = vmatpush1.msra.mxu0 0.0
    %92 = vmatprep.subr.mxu0 0.0
    %93 = vmatpush1.msra.mxu0 0.0
    %94 = vmatprep.subr.mxu0 0.0
    %95 = vmatpush1.msra.mxu0 0.0
    %96 = vmatprep.subr.mxu0 0.0
    %97 = vmatpush1.msra.mxu0 0.0
    %98 = vmatprep.subr.mxu0 0.0
    %99 = vmatpush1.msra.mxu0 0.0
    %100 = vmatprep.subr.mxu0 0.0
    %101 = vmatpush1.msra.mxu0 0.0
    %102 = vmatprep.subr.mxu0 0.0
    %103 = vmatpush1.msra.mxu0 0.0
    %104 = vmatprep.subr.mxu0 0.0
    %105 = vmatpush1.msra.mxu0 0.0
    %106 = vmatprep.subr.mxu0 0.0
    %107 = vmatpush1.msra.mxu0 0.0
    %108 = vmatprep.subr.mxu0 0.0
    %109 = vmatpush1.msra.mxu0 0.0
    %110 = vmatprep.subr.mxu0 0.0
    %111 = vmatpush1.msra.mxu0 0.0
    %112 = vmatprep.subr.mxu0 0.0
    %113 = vmatpush1.msra.mxu0 0.0
    %114 = vmatprep.subr.mxu0 0.0
    %115 = vmatpush1.msra.mxu0 0.0
    %116 = vmatprep.subr.mxu0 0.0
    %117 = vmatpush1.msra.mxu0 0.0
    %118 = vmatprep.subr.mxu0 0.0
    %119 = vmatpush1.msra.mxu0 0.0
    %120 = vmatprep.subr.mxu0 0.0
    %121 = vmatpush1.msra.mxu0 0.0
    %122 = vmatprep.subr.mxu0 0.0
    %123 = vmatpush1.msra.mxu0 0.0
    %124 = vmatprep.subr.mxu0 0.0
    %125 = vmatpush1.msra.mxu0 0.0
    %126 = vmatprep.subr.mxu0 0.0
    %127 = vmatpush1.msra.mxu0 0.0
    %128 = vmatprep.subr.mxu0 0.0
    %129 = vmatpush1.msra.mxu0 0.0
    %130 = vmatprep.subr.mxu0 0.0
    %131 = vmatpush1.msra.mxu0 0.0
    %132 = vmatprep.subr.mxu0 0.0
    %133 = vmatpush1.msra.mxu0 0.0
    %134 = vmatprep.subr.mxu0 0.0
    %135 = vmatpush1.msra.mxu0 0.0
    %136 = vmatprep.subr.mxu0 0.0
    %137 = vmatpush1.msra.mxu0 0.0
    %138 = vmatprep.subr.mxu0 0.0
    %139 = vmatpush1.msra.mxu0 0.0
    %140 = vmatprep.subr.mxu0 0.0
    %141 = vmatpush1.msra.mxu0 0.0
    %142 = vmatprep.subr.mxu0 0.0
    %143 = vmatpush1.msra.mxu0 0.0
    %144 = vmatprep.mubr.f32.mxu0 0.0
    %v145 = vand.u32 %v67, 4294901760
    %v146 = vsub.f32 %v67, %v145
    %v147 = vand.u32 %v146, 4294901760
    %v148 = vsub.f32 %v146, %v147
    %v149 = vand.u32 %v148, 4294901760
    %150 = vmatmul.mubr.f32.gmra.mrb[0].mxu0 %v149
    %v151 = vpop.f32.mrb[0].mxu0
    %v152 = vadd.f32 %v48, %v151
    %v153 = vpop.f32.mrb[0].mxu0
    %154 = vmatprep.mubr.f32.mxu0 0.0
    %v155 = vand.u32 %v70, 4294901760
    %v156 = vsub.f32 %v70, %v155
    %v157 = vand.u32 %v156, 4294901760
    %v158 = vsub.f32 %v156, %v157
    %v159 = vand.u32 %v158, 4294901760
    %160 = vmatmul.mubr.f32.gmra.mrb[0].mxu0 %v159
    %v161 = vpop.f32.mrb[0].mxu0
    %v162 = vadd.f32 %v53, %v161
    %v163 = vpop.f32.mrb[0].mxu0
    %164 = vmatprep.mubr.f32.mxu0 0.0
    %v165 = vand.u32 %v73, 4294901760
    %v166 = vsub.f32 %v73, %v165
    %v167 = vand.u32 %v166, 4294901760
    %v168 = vsub.f32 %v166, %v167
    %v169 = vand.u32 %v168, 4294901760
    %170 = vmatmul.mubr.f32.gmra.mrb[0].mxu0 %v169
    %v171 = vpop.f32.mrb[0].mxu0
    %v172 = vadd.f32 %v58, %v171
    %v173 = vpop.f32.mrb[0].mxu0
    %174 = vmatprep.mubr.f32.mxu0 0.0
    %v175 = vand.u32 %v76, 4294901760
    %v176 = vsub.f32 %v76, %v175
    %v177 = vand.u32 %v176, 4294901760
    %v178 = vsub.f32 %v176, %v177
    %v179 = vand.u32 %v178, 4294901760
    %180 = vmatmul.mubr.f32.gmra.mrb[0].mxu0 %v179
    %v181 = vpop.f32.mrb[0].mxu0
    %v182 = vadd.f32 %v63, %v181
    %v183 = vpop.f32.mrb[0].mxu0
    %184 = vdwg.mxu0
    %185 = vmatprep.subr.mxu0 0.0
    %v186 = vand.u32 %v35, 4294901760
    %v187 = vsub.f32 %v35, %v186
    %v188 = vand.u32 %v187, 4294901760
    %v189 = vsub.f32 %v187, %v188
    %v190 = vand.u32 %v189, 4294901760
    %191 = vmatpush1.msra.mxu0 %v190
    %192 = vmatprep.subr.mxu0 0.0
    %v193 = vand.u32 %v36, 4294901760
    %v194 = vsub.f32 %v36, %v193
    %v195 = vand.u32 %v194, 4294901760
    %v196 = vsub.f32 %v194, %v195
    %v197 = vand.u32 %v196, 4294901760
    %198 = vmatpush1.msra.mxu0 %v197
    %199 = vmatprep.subr.mxu0 0.0
    %200 = vmatpush1.msra.mxu0 0.0
    %201 = vmatprep.subr.mxu0 0.0
    %202 = vmatpush1.msra.mxu0 0.0
    %203 = vmatprep.subr.mxu0 0.0
    %204 = vmatpush1.msra.mxu0 0.0
    %205 = vmatprep.subr.mxu0 0.0
    %206 = vmatpush1.msra.mxu0 0.0
    %207 = vmatprep.subr.mxu0 0.0
    %208 = vmatpush1.msra.mxu0 0.0
    %209 = vmatprep.subr.mxu0 0.0
    %210 = vmatpush1.msra.mxu0 0.0
    %211 = vmatprep.subr.mxu0 0.0
    %212 = vmatpush1.msra.mxu0 0.0
    %213 = vmatprep.subr.mxu0 0.0
    %214 = vmatpush1.msra.mxu0 0.0
    %215 = vmatprep.subr.mxu0 0.0
    %216 = vmatpush1.msra.mxu0 0.0
    %217 = vmatprep.subr.mxu0 0.0
    %218 = vmatpush1.msra.mxu0 0.0
    %219 = vmatprep.subr.mxu0 0.0
    %220 = vmatpush1.msra.mxu0 0.0
    %221 = vmatprep.subr.mxu0 0.0
    %222 = vmatpush1.msra.mxu0 0.0
    %223 = vmatprep.subr.mxu0 0.0
    %224 = vmatpush1.msra.mxu0 0.0
    %225 = vmatprep.subr.mxu0 0.0
    %226 = vmatpush1.msra.mxu0 0.0
    %227 = vmatprep.subr.mxu0 0.0
    %228 = vmatpush1.msra.mxu0 0.0
    %229 = vmatprep.subr.mxu0 0.0
    %230 = vmatpush1.msra.mxu0 0.0
    %231 = vmatprep.subr.mxu0 0.0
    %232 = vmatpush1.msra.mxu0 0.0
    %233 = vmatprep.subr.mxu0 0.0
    %234 = vmatpush1.msra.mxu0 0.0
    %235 = vmatprep.subr.mxu0 0.0
    %236 = vmatpush1.msra.mxu0 0.0
    %237 = vmatprep.subr.mxu0 0.0
    %238 = vmatpush1.msra.mxu0 0.0
    %239 = vmatprep.subr.mxu0 0.0
    %240 = vmatpush1.msra.mxu0 0.0
    %241 = vmatprep.subr.mxu0 0.0
    %242 = vmatpush1.msra.mxu0 0.0
    %243 = vmatprep.subr.mxu0 0.0
    %244 = vmatpush1.msra.mxu0 0.0
    %245 = vmatprep.subr.mxu0 0.0
    %246 = vmatpush1.msra.mxu0 0.0
    %247 = vmatprep.subr.mxu0 0.0
    %248 = vmatpush1.msra.mxu0 0.0
    %249 = vmatprep.subr.mxu0 0.0
    %250 = vmatpush1.msra.mxu0 0.0
    %251 = vmatprep.subr.mxu0 0.0
    %252 = vmatpush1.msra.mxu0 0.0
    %253 = vmatprep.subr.mxu0 0.0
    %254 = vmatpush1.msra.mxu0 0.0
    %255 = vmatprep.subr.mxu0 0.0
    %256 = vmatpush1.msra.mxu0 0.0
    %257 = vmatprep.subr.mxu0 0.0
    %258 = vmatpush1.msra.mxu0 0.0
    %259 = vmatprep.mubr.f32.mxu0 0.0
    %v260 = vand.u32 %v67, 4294901760
    %261 = vmatmul.mubr.f32.gmra.mrb[0].mxu0 %v260
    %v262 = vpop.f32.mrb[0].mxu0
    %v263 = vadd.f32 %v152, %v262
    %v264 = vpop.f32.mrb[0].mxu0
    %265 = vmatprep.mubr.f32.mxu0 0.0
    %v266 = vand.u32 %v70, 4294901760
    %267 = vmatmul.mubr.f32.gmra.mrb[0].mxu0 %v266
    %v268 = vpop.f32.mrb[0].mxu0
    %v269 = vadd.f32 %v162, %v268
    %v270 = vpop.f32.mrb[0].mxu0
    %271 = vmatprep.mubr.f32.mxu0 0.0
    %v272 = vand.u32 %v73, 4294901760
    %273 = vmatmul.mubr.f32.gmra.mrb[0].mxu0 %v272
    %v274 = vpop.f32.mrb[0].mxu0
    %v275 = vadd.f32 %v172, %v274
    %v276 = vpop.f32.mrb[0].mxu0
    %277 = vmatprep.mubr.f32.mxu0 0.0
    %v278 = vand.u32 %v76, 4294901760
    %279 = vmatmul.mubr.f32.gmra.mrb[0].mxu0 %v278
    %v280 = vpop.f32.mrb[0].mxu0
    %v281 = vadd.f32 %v182, %v280
    %v282 = vpop.f32.mrb[0].mxu0
    %283 = vdwg.mxu0
    %284 = vmatprep.subr.mxu0 0.0
    %v285 = vand.u32 %v35, 4294901760
    %v286 = vsub.f32 %v35, %v285
    %287 = vmatpush1.msra.mxu0 %v286
    %288 = vmatprep.subr.mxu0 0.0
    %v289 = vand.u32 %v36, 4294901760
    %v290 = vsub.f32 %v36, %v289
    %291 = vmatpush1.msra.mxu0 %v290
    %292 = vmatprep.subr.mxu0 0.0
    %293 = vmatpush1.msra.mxu0 0.0
    %294 = vmatprep.subr.mxu0 0.0
    %295 = vmatpush1.msra.mxu0 0.0
    %296 = vmatprep.subr.mxu0 0.0
    %297 = vmatpush1.msra.mxu0 0.0
    %298 = vmatprep.subr.mxu0 0.0
    %299 = vmatpush1.msra.mxu0 0.0
    %300 = vmatprep.subr.mxu0 0.0
    %301 = vmatpush1.msra.mxu0 0.0
    %302 = vmatprep.subr.mxu0 0.0
    %303 = vmatpush1.msra.mxu0 0.0
    %304 = vmatprep.subr.mxu0 0.0
    %305 = vmatpush1.msra.mxu0 0.0
    %306 = vmatprep.subr.mxu0 0.0
    %307 = vmatpush1.msra.mxu0 0.0
    %308 = vmatprep.subr.mxu0 0.0
    %309 = vmatpush1.msra.mxu0 0.0
    %310 = vmatprep.subr.mxu0 0.0
    %311 = vmatpush1.msra.mxu0 0.0
    %312 = vmatprep.subr.mxu0 0.0
    %313 = vmatpush1.msra.mxu0 0.0
    %314 = vmatprep.subr.mxu0 0.0
    %315 = vmatpush1.msra.mxu0 0.0
    %316 = vmatprep.subr.mxu0 0.0
    %317 = vmatpush1.msra.mxu0 0.0
    %318 = vmatprep.subr.mxu0 0.0
    %319 = vmatpush1.msra.mxu0 0.0
    %320 = vmatprep.subr.mxu0 0.0
    %321 = vmatpush1.msra.mxu0 0.0
    %322 = vmatprep.subr.mxu0 0.0
    %323 = vmatpush1.msra.mxu0 0.0
    %324 = vmatprep.subr.mxu0 0.0
    %325 = vmatpush1.msra.mxu0 0.0
    %326 = vmatprep.subr.mxu0 0.0
    %327 = vmatpush1.msra.mxu0 0.0
    %328 = vmatprep.subr.mxu0 0.0
    %329 = vmatpush1.msra.mxu0 0.0
    %330 = vmatprep.subr.mxu0 0.0
    %331 = vmatpush1.msra.mxu0 0.0
    %332 = vmatprep.subr.mxu0 0.0
    %333 = vmatpush1.msra.mxu0 0.0
    %334 = vmatprep.subr.mxu0 0.0
    %335 = vmatpush1.msra.mxu0 0.0
    %336 = vmatprep.subr.mxu0 0.0
    %337 = vmatpush1.msra.mxu0 0.0
    %338 = vmatprep.subr.mxu0 0.0
    %339 = vmatpush1.msra.mxu0 0.0
    %340 = vmatprep.subr.mxu0 0.0
    %341 = vmatpush1.msra.mxu0 0.0
    %342 = vmatprep.subr.mxu0 0.0
    %343 = vmatpush1.msra.mxu0 0.0
    %344 = vmatprep.subr.mxu0 0.0
    %345 = vmatpush1.msra.mxu0 0.0
    %346 = vmatprep.subr.mxu0 0.0
    %347 = vmatpush1.msra.mxu0 0.0
    %348 = vmatprep.subr.mxu0 0.0
    %349 = vmatpush1.msra.mxu0 0.0
    %350 = vmatprep.subr.mxu0 0.0
    %351 = vmatpush1.msra.mxu0 0.0
    %352 = vmatprep.mubr.f32.mxu0 0.0
    %v353 = vand.u32 %v67, 4294901760
    %v354 = vsub.f32 %v67, %v353
    %355 = vmatmul.mubr.f32.gmra.mrb[0].mxu0 %v354
    %v356 = vpop.f32.mrb[0].mxu0
    %v357 = vadd.f32 %v263, %v356
    %v358 = vpop.f32.mrb[0].mxu0
    %359 = vmatprep.mubr.f32.mxu0 0.0
    %v360 = vand.u32 %v70, 4294901760
    %v361 = vsub.f32 %v70, %v360
    %362 = vmatmul.mubr.f32.gmra.mrb[0].mxu0 %v361
    %v363 = vpop.f32.mrb[0].mxu0
    %v364 = vadd.f32 %v269, %v363
    %v365 = vpop.f32.mrb[0].mxu0
    %366 = vmatprep.mubr.f32.mxu0 0.0
    %v367 = vand.u32 %v73, 4294901760
    %v368 = vsub.f32 %v73, %v367
    %369 = vmatmul.mubr.f32.gmra.mrb[0].mxu0 %v368
    %v370 = vpop.f32.mrb[0].mxu0
    %v371 = vadd.f32 %v275, %v370
    %v372 = vpop.f32.mrb[0].mxu0
    %373 = vmatprep.mubr.f32.mxu0 0.0
    %v374 = vand.u32 %v76, 4294901760
    %v375 = vsub.f32 %v76, %v374
    %376 = vmatmul.mubr.f32.gmra.mrb[0].mxu0 %v375
    %v377 = vpop.f32.mrb[0].mxu0
    %v378 = vadd.f32 %v281, %v377
    %v379 = vpop.f32.mrb[0].mxu0
    %380 = vdwg.mxu0
    %381 = vmatprep.subr.mxu0 0.0
    %v382 = vand.u32 %v35, 4294901760
    %383 = vmatpush1.msra.mxu0 %v382
    %384 = vmatprep.subr.mxu0 0.0
    %v385 = vand.u32 %v36, 4294901760
    %386 = vmatpush1.msra.mxu0 %v385
    %387 = vmatprep.subr.mxu0 0.0
    %388 = vmatpush1.msra.mxu0 0.0
    %389 = vmatprep.subr.mxu0 0.0
    %390 = vmatpush1.msra.mxu0 0.0
    %391 = vmatprep.subr.mxu0 0.0
    %392 = vmatpush1.msra.mxu0 0.0
    %393 = vmatprep.subr.mxu0 0.0
    %394 = vmatpush1.msra.mxu0 0.0
    %395 = vmatprep.subr.mxu0 0.0
    %396 = vmatpush1.msra.mxu0 0.0
    %397 = vmatprep.subr.mxu0 0.0
    %398 = vmatpush1.msra.mxu0 0.0
    %399 = vmatprep.subr.mxu0 0.0
    %400 = vmatpush1.msra.mxu0 0.0
    %401 = vmatprep.subr.mxu0 0.0
    %402 = vmatpush1.msra.mxu0 0.0
    %403 = vmatprep.subr.mxu0 0.0
    %404 = vmatpush1.msra.mxu0 0.0
    %405 = vmatprep.subr.mxu0 0.0
    %406 = vmatpush1.msra.mxu0 0.0
    %407 = vmatprep.subr.mxu0 0.0
    %408 = vmatpush1.msra.mxu0 0.0
    %409 = vmatprep.subr.mxu0 0.0
    %410 = vmatpush1.msra.mxu0 0.0
    %411 = vmatprep.subr.mxu0 0.0
    %412 = vmatpush1.msra.mxu0 0.0
    %413 = vmatprep.subr.mxu0 0.0
    %414 = vmatpush1.msra.mxu0 0.0
    %415 = vmatprep.subr.mxu0 0.0
    %416 = vmatpush1.msra.mxu0 0.0
    %417 = vmatprep.subr.mxu0 0.0
    %418 = vmatpush1.msra.mxu0 0.0
    %419 = vmatprep.subr.mxu0 0.0
    %420 = vmatpush1.msra.mxu0 0.0
    %421 = vmatprep.subr.mxu0 0.0
    %422 = vmatpush1.msra.mxu0 0.0
    %423 = vmatprep.subr.mxu0 0.0
    %424 = vmatpush1.msra.mxu0 0.0
    %425 = vmatprep.subr.mxu0 0.0
    %426 = vmatpush1.msra.mxu0 0.0
    %427 = vmatprep.subr.mxu0 0.0
    %428 = vmatpush1.msra.mxu0 0.0
    %429 = vmatprep.subr.mxu0 0.0
    %430 = vmatpush1.msra.mxu0 0.0
    %431 = vmatprep.subr.mxu0 0.0
    %432 = vmatpush1.msra.mxu0 0.0
    %433 = vmatprep.subr.mxu0 0.0
    %434 = vmatpush1.msra.mxu0 0.0
    %435 = vmatprep.subr.mxu0 0.0
    %436 = vmatpush1.msra.mxu0 0.0
    %437 = vmatprep.subr.mxu0 0.0
    %438 = vmatpush1.msra.mxu0 0.0
    %439 = vmatprep.subr.mxu0 0.0
    %440 = vmatpush1.msra.mxu0 0.0
    %441 = vmatprep.subr.mxu0 0.0
    %442 = vmatpush1.msra.mxu0 0.0
    %443 = vmatprep.subr.mxu0 0.0
    %444 = vmatpush1.msra.mxu0 0.0
    %445 = vmatprep.subr.mxu0 0.0
    %446 = vmatpush1.msra.mxu0 0.0
    %447 = vmatprep.mubr.f32.mxu0 0.0
    %v448 = vand.u32 %v67, 4294901760
    %v449 = vsub.f32 %v67, %v448
    %v450 = vand.u32 %v449, 4294901760
    %451 = vmatmul.mubr.f32.gmra.mrb[0].mxu0 %v450
    %v452 = vpop.f32.mrb[0].mxu0
    %v453 = vadd.f32 %v357, %v452
    %v454 = vpop.f32.mrb[0].mxu0
    %455 = vmatprep.mubr.f32.mxu0 0.0
    %v456 = vand.u32 %v70, 4294901760
    %v457 = vsub.f32 %v70, %v456
    %v458 = vand.u32 %v457, 4294901760
    %459 = vmatmul.mubr.f32.gmra.mrb[0].mxu0 %v458
    %v460 = vpop.f32.mrb[0].mxu0
    %v461 = vadd.f32 %v364, %v460
    %v462 = vpop.f32.mrb[0].mxu0
    %463 = vmatprep.mubr.f32.mxu0 0.0
    %v464 = vand.u32 %v73, 4294901760
    %v465 = vsub.f32 %v73, %v464
    %v466 = vand.u32 %v465, 4294901760
    %467 = vmatmul.mubr.f32.gmra.mrb[0].mxu0 %v466
    %v468 = vpop.f32.mrb[0].mxu0
    %v469 = vadd.f32 %v371, %v468
    %v470 = vpop.f32.mrb[0].mxu0
    %471 = vmatprep.mubr.f32.mxu0 0.0
    %v472 = vand.u32 %v76, 4294901760
    %v473 = vsub.f32 %v76, %v472
    %v474 = vand.u32 %v473, 4294901760
    %475 = vmatmul.mubr.f32.gmra.mrb[0].mxu0 %v474
    %v476 = vpop.f32.mrb[0].mxu0
    %v477 = vadd.f32 %v378, %v476
    %v478 = vpop.f32.mrb[0].mxu0
    %479 = vdwg.mxu0
    %480 = vmatprep.subr.mxu0 0.0
    %v481 = vand.u32 %v35, 4294901760
    %v482 = vsub.f32 %v35, %v481
    %v483 = vand.u32 %v482, 4294901760
    %484 = vmatpush1.msra.mxu0 %v483
    %485 = vmatprep.subr.mxu0 0.0
    %v486 = vand.u32 %v36, 4294901760
    %v487 = vsub.f32 %v36, %v486
    %v488 = vand.u32 %v487, 4294901760
    %489 = vmatpush1.msra.mxu0 %v488
    %490 = vmatprep.subr.mxu0 0.0
    %491 = vmatpush1.msra.mxu0 0.0
    %492 = vmatprep.subr.mxu0 0.0
    %493 = vmatpush1.msra.mxu0 0.0
    %494 = vmatprep.subr.mxu0 0.0
    %495 = vmatpush1.msra.mxu0 0.0
    %496 = vmatprep.subr.mxu0 0.0
    %497 = vmatpush1.msra.mxu0 0.0
    %498 = vmatprep.subr.mxu0 0.0
    %499 = vmatpush1.msra.mxu0 0.0
    %500 = vmatprep.subr.mxu0 0.0
    %501 = vmatpush1.msra.mxu0 0.0
    %502 = vmatprep.subr.mxu0 0.0
    %503 = vmatpush1.msra.mxu0 0.0
    %504 = vmatprep.subr.mxu0 0.0
    %505 = vmatpush1.msra.mxu0 0.0
    %506 = vmatprep.subr.mxu0 0.0
    %507 = vmatpush1.msra.mxu0 0.0
    %508 = vmatprep.subr.mxu0 0.0
    %509 = vmatpush1.msra.mxu0 0.0
    %510 = vmatprep.subr.mxu0 0.0
    %511 = vmatpush1.msra.mxu0 0.0
    %512 = vmatprep.subr.mxu0 0.0
    %513 = vmatpush1.msra.mxu0 0.0
    %514 = vmatprep.subr.mxu0 0.0
    %515 = vmatpush1.msra.mxu0 0.0
    %516 = vmatprep.subr.mxu0 0.0
    %517 = vmatpush1.msra.mxu0 0.0
    %518 = vmatprep.subr.mxu0 0.0
    %519 = vmatpush1.msra.mxu0 0.0
    %520 = vmatprep.subr.mxu0 0.0
    %521 = vmatpush1.msra.mxu0 0.0
    %522 = vmatprep.subr.mxu0 0.0
    %523 = vmatpush1.msra.mxu0 0.0
    %524 = vmatprep.subr.mxu0 0.0
    %525 = vmatpush1.msra.mxu0 0.0
    %526 = vmatprep.subr.mxu0 0.0
    %527 = vmatpush1.msra.mxu0 0.0
    %528 = vmatprep.subr.mxu0 0.0
    %529 = vmatpush1.msra.mxu0 0.0
    %530 = vmatprep.subr.mxu0 0.0
    %531 = vmatpush1.msra.mxu0 0.0
    %532 = vmatprep.subr.mxu0 0.0
    %533 = vmatpush1.msra.mxu0 0.0
    %534 = vmatprep.subr.mxu0 0.0
    %535 = vmatpush1.msra.mxu0 0.0
    %536 = vmatprep.subr.mxu0 0.0
    %537 = vmatpush1.msra.mxu0 0.0
    %538 = vmatprep.subr.mxu0 0.0
    %539 = vmatpush1.msra.mxu0 0.0
    %540 = vmatprep.subr.mxu0 0.0
    %541 = vmatpush1.msra.mxu0 0.0
    %542 = vmatprep.subr.mxu0 0.0
    %543 = vmatpush1.msra.mxu0 0.0
    %544 = vmatprep.subr.mxu0 0.0
    %545 = vmatpush1.msra.mxu0 0.0
    %546 = vmatprep.subr.mxu0 0.0
    %547 = vmatpush1.msra.mxu0 0.0
    %548 = vmatprep.subr.mxu0 0.0
    %549 = vmatpush1.msra.mxu0 0.0
    %550 = vmatprep.mubr.f32.mxu0 0.0
    %v551 = vand.u32 %v67, 4294901760
    %552 = vmatmul.mubr.f32.gmra.mrb[0].mxu0 %v551
    %v553 = vpop.f32.mrb[0].mxu0
    %v554 = vadd.f32 %v453, %v553
    %v555 = vpop.f32.mrb[0].mxu0
    %556 = vmatprep.mubr.f32.mxu0 0.0
    %v557 = vand.u32 %v70, 4294901760
    %558 = vmatmul.mubr.f32.gmra.mrb[0].mxu0 %v557
    %v559 = vpop.f32.mrb[0].mxu0
    %v560 = vadd.f32 %v461, %v559
    %v561 = vpop.f32.mrb[0].mxu0
    %562 = vmatprep.mubr.f32.mxu0 0.0
    %v563 = vand.u32 %v73, 4294901760
    %564 = vmatmul.mubr.f32.gmra.mrb[0].mxu0 %v563
    %v565 = vpop.f32.mrb[0].mxu0
    %v566 = vadd.f32 %v469, %v565
    %v567 = vpop.f32.mrb[0].mxu0
    %568 = vmatprep.mubr.f32.mxu0 0.0
    %v569 = vand.u32 %v76, 4294901760
    %570 = vmatmul.mubr.f32.gmra.mrb[0].mxu0 %v569
    %v571 = vpop.f32.mrb[0].mxu0
    %v572 = vadd.f32 %v477, %v571
    %v573 = vpop.f32.mrb[0].mxu0
    %574 = vdwg.mxu0
    %575 = vmatprep.subr.mxu0 0.0
    %v576 = vand.u32 %v35, 4294901760
    %577 = vmatpush1.msra.mxu0 %v576
    %578 = vmatprep.subr.mxu0 0.0
    %v579 = vand.u32 %v36, 4294901760
    %580 = vmatpush1.msra.mxu0 %v579
    %581 = vmatprep.subr.mxu0 0.0
    %582 = vmatpush1.msra.mxu0 0.0
    %583 = vmatprep.subr.mxu0 0.0
    %584 = vmatpush1.msra.mxu0 0.0
    %585 = vmatprep.subr.mxu0 0.0
    %586 = vmatpush1.msra.mxu0 0.0
    %587 = vmatprep.subr.mxu0 0.0
    %588 = vmatpush1.msra.mxu0 0.0
    %589 = vmatprep.subr.mxu0 0.0
    %590 = vmatpush1.msra.mxu0 0.0
    %591 = vmatprep.subr.mxu0 0.0
    %592 = vmatpush1.msra.mxu0 0.0
    %593 = vmatprep.subr.mxu0 0.0
    %594 = vmatpush1.msra.mxu0 0.0
    %595 = vmatprep.subr.mxu0 0.0
    %596 = vmatpush1.msra.mxu0 0.0
    %597 = vmatprep.subr.mxu0 0.0
    %598 = vmatpush1.msra.mxu0 0.0
    %599 = vmatprep.subr.mxu0 0.0
    %600 = vmatpush1.msra.mxu0 0.0
    %601 = vmatprep.subr.mxu0 0.0
    %602 = vmatpush1.msra.mxu0 0.0
    %603 = vmatprep.subr.mxu0 0.0
    %604 = vmatpush1.msra.mxu0 0.0
    %605 = vmatprep.subr.mxu0 0.0
    %606 = vmatpush1.msra.mxu0 0.0
    %607 = vmatprep.subr.mxu0 0.0
    %608 = vmatpush1.msra.mxu0 0.0
    %609 = vmatprep.subr.mxu0 0.0
    %610 = vmatpush1.msra.mxu0 0.0
    %611 = vmatprep.subr.mxu0 0.0
    %612 = vmatpush1.msra.mxu0 0.0
    %613 = vmatprep.subr.mxu0 0.0
    %614 = vmatpush1.msra.mxu0 0.0
    %615 = vmatprep.subr.mxu0 0.0
    %616 = vmatpush1.msra.mxu0 0.0
    %617 = vmatprep.subr.mxu0 0.0
    %618 = vmatpush1.msra.mxu0 0.0
    %619 = vmatprep.subr.mxu0 0.0
    %620 = vmatpush1.msra.mxu0 0.0
    %621 = vmatprep.subr.mxu0 0.0
    %622 = vmatpush1.msra.mxu0 0.0
    %623 = vmatprep.subr.mxu0 0.0
    %624 = vmatpush1.msra.mxu0 0.0
    %625 = vmatprep.subr.mxu0 0.0
    %626 = vmatpush1.msra.mxu0 0.0
    %627 = vmatprep.subr.mxu0 0.0
    %628 = vmatpush1.msra.mxu0 0.0
    %629 = vmatprep.subr.mxu0 0.0
    %630 = vmatpush1.msra.mxu0 0.0
    %631 = vmatprep.subr.mxu0 0.0
    %632 = vmatpush1.msra.mxu0 0.0
    %633 = vmatprep.subr.mxu0 0.0
    %634 = vmatpush1.msra.mxu0 0.0
    %635 = vmatprep.subr.mxu0 0.0
    %636 = vmatpush1.msra.mxu0 0.0
    %637 = vmatprep.subr.mxu0 0.0
    %638 = vmatpush1.msra.mxu0 0.0
    %639 = vmatprep.subr.mxu0 0.0
    %640 = vmatpush1.msra.mxu0 0.0
    %641 = vmatprep.mubr.f32.mxu0 0.0
    %v642 = vand.u32 %v67, 4294901760
    %643 = vmatmul.mubr.f32.gmra.mrb[0].mxu0 %v642
    %v644 = vpop.f32.mrb[0].mxu0
    %v645 = vadd.f32 %v554, %v644
    %v646 = vpop.f32.mrb[0].mxu0
    %647 = vmatprep.mubr.f32.mxu0 0.0
    %v648 = vand.u32 %v70, 4294901760
    %649 = vmatmul.mubr.f32.gmra.mrb[0].mxu0 %v648
    %v650 = vpop.f32.mrb[0].mxu0
    %v651 = vadd.f32 %v560, %v650
    %v652 = vpop.f32.mrb[0].mxu0
    %653 = vmatprep.mubr.f32.mxu0 0.0
    %v654 = vand.u32 %v73, 4294901760
    %655 = vmatmul.mubr.f32.gmra.mrb[0].mxu0 %v654
    %v656 = vpop.f32.mrb[0].mxu0
    %v657 = vadd.f32 %v566, %v656
    %v658 = vpop.f32.mrb[0].mxu0
    %659 = vmatprep.mubr.f32.mxu0 0.0
    %v660 = vand.u32 %v76, 4294901760
    %661 = vmatmul.mubr.f32.gmra.mrb[0].mxu0 %v660
    %v662 = vpop.f32.mrb[0].mxu0
    %v663 = vadd.f32 %v572, %v662
    %v664 = vpop.f32.mrb[0].mxu0
    %665 = vdwg.mxu0
    %v666 = vtanh.pop %v645
    %v667 = vtanh.pop %v651
    %v668 = vtanh.pop %v657
    %v669 = vtanh.pop %v663
    %v670 = vld [vmem:[%s3] sm:$0xff]
    %v671 = vld [vmem:[%s3 + $0x8] sm:$0xff]
    %v672 = vld [vmem:[%s3 + $0x10] sm:$0xff]
    %v673 = vld [vmem:[%s3 + $0x18] sm:$0xff]
    %v674 = vld [vmem:[%s4] sm:$0xff]
    %v675 = vld [vmem:[%s4 + $0x8] sm:$0xff]
    %v676 = vld [vmem:[%s4 + $0x10] sm:$0xff]
    %v677 = vld [vmem:[%s4 + $0x18] sm:$0xff]
    %679 = vset.pattern.permute.xlu0 0
    %680 = vperm.xlu0 %679, %v674
    %v681 = vpop.permute.xlu0 %680
    %684 = vset.pattern.permute.xlu0 0
    %685 = vperm.xlu0 %684, %v675
    %v686 = vpop.permute.xlu0 %685
    %689 = vset.pattern.permute.xlu0 0
    %690 = vperm.xlu0 %689, %v676
    %v691 = vpop.permute.xlu0 %690
    %694 = vset.pattern.permute.xlu0 0
    %695 = vperm.xlu0 %694, %v677
    %v696 = vpop.permute.xlu0 %695
    %vm698 = vcmask 261120
    %v700 = vsel %vm698, %v670, 0
    %v703 = vsel %vm698, %v671, 0
    %v706 = vsel %vm698, %v672, 0
    %v709 = vsel %vm698, %v673, 0
    %711 = vmatprep.subr.mxu0 0.0
    %v712 = vand.u32 %v666, 4294901760
    %713 = vmatpush1.msra.mxu0 %v712
    %714 = vmatprep.subr.mxu0 0.0
    %v715 = vand.u32 %v667, 4294901760
    %716 = vmatpush1.msra.mxu0 %v715
    %717 = vmatprep.subr.mxu0 0.0
    %v718 = vand.u32 %v668, 4294901760
    %719 = vmatpush1.msra.mxu0 %v718
    %720 = vmatprep.subr.mxu0 0.0
    %v721 = vand.u32 %v669, 4294901760
    %722 = vmatpush1.msra.mxu0 %v721
    %723 = vmatprep.subr.mxu0 0.0
    %724 = vmatpush1.msra.mxu0 0.0
    %725 = vmatprep.subr.mxu0 0.0
    %726 = vmatpush1.msra.mxu0 0.0
    %727 = vmatprep.subr.mxu0 0.0
    %728 = vmatpush1.msra.mxu0 0.0
    %729 = vmatprep.subr.mxu0 0.0
    %730 = vmatpush1.msra.mxu0 0.0
    %731 = vmatprep.subr.mxu0 0.0
    %732 = vmatpush1.msra.mxu0 0.0
    %733 = vmatprep.subr.mxu0 0.0
    %734 = vmatpush1.msra.mxu0 0.0
    %735 = vmatprep.subr.mxu0 0.0
    %736 = vmatpush1.msra.mxu0 0.0
    %737 = vmatprep.subr.mxu0 0.0
    %738 = vmatpush1.msra.mxu0 0.0
    %739 = vmatprep.subr.mxu0 0.0
    %740 = vmatpush1.msra.mxu0 0.0
    %741 = vmatprep.subr.mxu0 0.0
    %742 = vmatpush1.msra.mxu0 0.0
    %743 = vmatprep.subr.mxu0 0.0
    %744 = vmatpush1.msra.mxu0 0.0
    %745 = vmatprep.subr.mxu0 0.0
    %746 = vmatpush1.msra.mxu0 0.0
    %747 = vmatprep.subr.mxu0 0.0
    %748 = vmatpush1.msra.mxu0 0.0
    %749 = vmatprep.subr.mxu0 0.0
    %750 = vmatpush1.msra.mxu0 0.0
    %751 = vmatprep.subr.mxu0 0.0
    %752 = vmatpush1.msra.mxu0 0.0
    %753 = vmatprep.subr.mxu0 0.0
    %754 = vmatpush1.msra.mxu0 0.0
    %755 = vmatprep.subr.mxu0 0.0
    %756 = vmatpush1.msra.mxu0 0.0
    %757 = vmatprep.subr.mxu0 0.0
    %758 = vmatpush1.msra.mxu0 0.0
    %759 = vmatprep.subr.mxu0 0.0
    %760 = vmatpush1.msra.mxu0 0.0
    %761 = vmatprep.subr.mxu0 0.0
    %762 = vmatpush1.msra.mxu0 0.0
    %763 = vmatprep.subr.mxu0 0.0
    %764 = vmatpush1.msra.mxu0 0.0
    %765 = vmatprep.subr.mxu0 0.0
    %766 = vmatpush1.msra.mxu0 0.0
    %767 = vmatprep.subr.mxu0 0.0
    %768 = vmatpush1.msra.mxu0 0.0
    %769 = vmatprep.subr.mxu0 0.0
    %770 = vmatpush1.msra.mxu0 0.0
    %771 = vmatprep.subr.mxu0 0.0
    %772 = vmatpush1.msra.mxu0 0.0
    %773 = vmatprep.subr.mxu0 0.0
    %774 = vmatpush1.msra.mxu0 0.0
    %775 = vmatprep.subr.mxu0 0.0
    %776 = vmatpush1.msra.mxu0 0.0
    %777 = vmatprep.subr.mxu0 0.0
    %778 = vmatpush1.msra.mxu0 0.0
    %779 = vmatprep.mubr.f32.mxu0 0.0
    %v780 = vand.u32 %v700, 4294901760
    %v781 = vsub.f32 %v700, %v780
    %v782 = vand.u32 %v781, 4294901760
    %v783 = vsub.f32 %v781, %v782
    %v784 = vand.u32 %v783, 4294901760
    %785 = vmatmul.mubr.f32.gmra.mrb[0].mxu0 %v784
    %v786 = vpop.f32.mrb[0].mxu0
    %v787 = vadd.f32 %v681, %v786
    %v788 = vpop.f32.mrb[0].mxu0
    %789 = vmatprep.mubr.f32.mxu0 0.0
    %v790 = vand.u32 %v703, 4294901760
    %v791 = vsub.f32 %v703, %v790
    %v792 = vand.u32 %v791, 4294901760
    %v793 = vsub.f32 %v791, %v792
    %v794 = vand.u32 %v793, 4294901760
    %795 = vmatmul.mubr.f32.gmra.mrb[0].mxu0 %v794
    %v796 = vpop.f32.mrb[0].mxu0
    %v797 = vadd.f32 %v686, %v796
    %v798 = vpop.f32.mrb[0].mxu0
    %799 = vmatprep.mubr.f32.mxu0 0.0
    %v800 = vand.u32 %v706, 4294901760
    %v801 = vsub.f32 %v706, %v800
    %v802 = vand.u32 %v801, 4294901760
    %v803 = vsub.f32 %v801, %v802
    %v804 = vand.u32 %v803, 4294901760
    %805 = vmatmul.mubr.f32.gmra.mrb[0].mxu0 %v804
    %v806 = vpop.f32.mrb[0].mxu0
    %v807 = vadd.f32 %v691, %v806
    %v808 = vpop.f32.mrb[0].mxu0
    %809 = vmatprep.mubr.f32.mxu0 0.0
    %v810 = vand.u32 %v709, 4294901760
    %v811 = vsub.f32 %v709, %v810
    %v812 = vand.u32 %v811, 4294901760
    %v813 = vsub.f32 %v811, %v812
    %v814 = vand.u32 %v813, 4294901760
    %815 = vmatmul.mubr.f32.gmra.mrb[0].mxu0 %v814
    %v816 = vpop.f32.mrb[0].mxu0
    %v817 = vadd.f32 %v696, %v816
    %v818 = vpop.f32.mrb[0].mxu0
    %819 = vdwg.mxu0
    %820 = vmatprep.subr.mxu0 0.0
    %v821 = vand.u32 %v666, 4294901760
    %v822 = vsub.f32 %v666, %v821
    %v823 = vand.u32 %v822, 4294901760
    %v824 = vsub.f32 %v822, %v823
    %v825 = vand.u32 %v824, 4294901760
    %826 = vmatpush1.msra.mxu0 %v825
    %827 = vmatprep.subr.mxu0 0.0
    %v828 = vand.u32 %v667, 4294901760
    %v829 = vsub.f32 %v667, %v828
    %v830 = vand.u32 %v829, 4294901760
    %v831 = vsub.f32 %v829, %v830
    %v832 = vand.u32 %v831, 4294901760
    %833 = vmatpush1.msra.mxu0 %v832
    %834 = vmatprep.subr.mxu0 0.0
    %v835 = vand.u32 %v668, 4294901760
    %v836 = vsub.f32 %v668, %v835
    %v837 = vand.u32 %v836, 4294901760
    %v838 = vsub.f32 %v836, %v837
    %v839 = vand.u32 %v838, 4294901760
    %840 = vmatpush1.msra.mxu0 %v839
    %841 = vmatprep.subr.mxu0 0.0
    %v842 = vand.u32 %v669, 4294901760
    %v843 = vsub.f32 %v669, %v842
    %v844 = vand.u32 %v843, 4294901760
    %v845 = vsub.f32 %v843, %v844
    %v846 = vand.u32 %v845, 4294901760
    %847 = vmatpush1.msra.mxu0 %v846
    %848 = vmatprep.subr.mxu0 0.0
    %849 = vmatpush1.msra.mxu0 0.0
    %850 = vmatprep.subr.mxu0 0.0
    %851 = vmatpush1.msra.mxu0 0.0
    %852 = vmatprep.subr.mxu0 0.0
    %853 = vmatpush1.msra.mxu0 0.0
    %854 = vmatprep.subr.mxu0 0.0
    %855 = vmatpush1.msra.mxu0 0.0
    %856 = vmatprep.subr.mxu0 0.0
    %857 = vmatpush1.msra.mxu0 0.0
    %858 = vmatprep.subr.mxu0 0.0
    %859 = vmatpush1.msra.mxu0 0.0
    %860 = vmatprep.subr.mxu0 0.0
    %861 = vmatpush1.msra.mxu0 0.0
    %862 = vmatprep.subr.mxu0 0.0
    %863 = vmatpush1.msra.mxu0 0.0
    %864 = vmatprep.subr.mxu0 0.0
    %865 = vmatpush1.msra.mxu0 0.0
    %866 = vmatprep.subr.mxu0 0.0
    %867 = vmatpush1.msra.mxu0 0.0
    %868 = vmatprep.subr.mxu0 0.0
    %869 = vmatpush1.msra.mxu0 0.0
    %870 = vmatprep.subr.mxu0 0.0
    %871 = vmatpush1.msra.mxu0 0.0
    %872 = vmatprep.subr.mxu0 0.0
    %873 = vmatpush1.msra.mxu0 0.0
    %874 = vmatprep.subr.mxu0 0.0
    %875 = vmatpush1.msra.mxu0 0.0
    %876 = vmatprep.subr.mxu0 0.0
    %877 = vmatpush1.msra.mxu0 0.0
    %878 = vmatprep.subr.mxu0 0.0
    %879 = vmatpush1.msra.mxu0 0.0
    %880 = vmatprep.subr.mxu0 0.0
    %881 = vmatpush1.msra.mxu0 0.0
    %882 = vmatprep.subr.mxu0 0.0
    %883 = vmatpush1.msra.mxu0 0.0
    %884 = vmatprep.subr.mxu0 0.0
    %885 = vmatpush1.msra.mxu0 0.0
    %886 = vmatprep.subr.mxu0 0.0
    %887 = vmatpush1.msra.mxu0 0.0
    %888 = vmatprep.subr.mxu0 0.0
    %889 = vmatpush1.msra.mxu0 0.0
    %890 = vmatprep.subr.mxu0 0.0
    %891 = vmatpush1.msra.mxu0 0.0
    %892 = vmatprep.subr.mxu0 0.0
    %893 = vmatpush1.msra.mxu0 0.0
    %894 = vmatprep.subr.mxu0 0.0
    %895 = vmatpush1.msra.mxu0 0.0
    %896 = vmatprep.subr.mxu0 0.0
    %897 = vmatpush1.msra.mxu0 0.0
    %898 = vmatprep.subr.mxu0 0.0
    %899 = vmatpush1.msra.mxu0 0.0
    %900 = vmatprep.subr.mxu0 0.0
    %901 = vmatpush1.msra.mxu0 0.0
    %902 = vmatprep.subr.mxu0 0.0
    %903 = vmatpush1.msra.mxu0 0.0
    %904 = vmatprep.mubr.f32.mxu0 0.0
    %v905 = vand.u32 %v700, 4294901760
    %906 = vmatmul.mubr.f32.gmra.mrb[0].mxu0 %v905
    %v907 = vpop.f32.mrb[0].mxu0
    %v908 = vadd.f32 %v787, %v907
    %v909 = vpop.f32.mrb[0].mxu0
    %910 = vmatprep.mubr.f32.mxu0 0.0
    %v911 = vand.u32 %v703, 4294901760
    %912 = vmatmul.mubr.f32.gmra.mrb[0].mxu0 %v911
    %v913 = vpop.f32.mrb[0].mxu0
    %v914 = vadd.f32 %v797, %v913
    %v915 = vpop.f32.mrb[0].mxu0
    %916 = vmatprep.mubr.f32.mxu0 0.0
    %v917 = vand.u32 %v706, 4294901760
    %918 = vmatmul.mubr.f32.gmra.mrb[0].mxu0 %v917
    %v919 = vpop.f32.mrb[0].mxu0
    %v920 = vadd.f32 %v807, %v919
    %v921 = vpop.f32.mrb[0].mxu0
    %922 = vmatprep.mubr.f32.mxu0 0.0
    %v923 = vand.u32 %v709, 4294901760
    %924 = vmatmul.mubr.f32.gmra.mrb[0].mxu0 %v923
    %v925 = vpop.f32.mrb[0].mxu0
    %v926 = vadd.f32 %v817, %v925
    %v927 = vpop.f32.mrb[0].mxu0
    %928 = vdwg.mxu0
    %929 = vmatprep.subr.mxu0 0.0
    %v930 = vand.u32 %v666, 4294901760
    %v931 = vsub.f32 %v666, %v930
    %932 = vmatpush1.msra.mxu0 %v931
    %933 = vmatprep.subr.mxu0 0.0
    %v934 = vand.u32 %v667, 4294901760
    %v935 = vsub.f32 %v667, %v934
    %936 = vmatpush1.msra.mxu0 %v935
    %937 = vmatprep.subr.mxu0 0.0
    %v938 = vand.u32 %v668, 4294901760
    %v939 = vsub.f32 %v668, %v938
    %940 = vmatpush1.msra.mxu0 %v939
    %941 = vmatprep.subr.mxu0 0.0
    %v942 = vand.u32 %v669, 4294901760
    %v943 = vsub.f32 %v669, %v942
    %944 = vmatpush1.msra.mxu0 %v943
    %945 = vmatprep.subr.mxu0 0.0
    %946 = vmatpush1.msra.mxu0 0.0
    %947 = vmatprep.subr.mxu0 0.0
    %948 = vmatpush1.msra.mxu0 0.0
    %949 = vmatprep.subr.mxu0 0.0
    %950 = vmatpush1.msra.mxu0 0.0
    %951 = vmatprep.subr.mxu0 0.0
    %952 = vmatpush1.msra.mxu0 0.0
    %953 = vmatprep.subr.mxu0 0.0
    %954 = vmatpush1.msra.mxu0 0.0
    %955 = vmatprep.subr.mxu0 0.0
    %956 = vmatpush1.msra.mxu0 0.0
    %957 = vmatprep.subr.mxu0 0.0
    %958 = vmatpush1.msra.mxu0 0.0
    %959 = vmatprep.subr.mxu0 0.0
    %960 = vmatpush1.msra.mxu0 0.0
    %961 = vmatprep.subr.mxu0 0.0
    %962 = vmatpush1.msra.mxu0 0.0
    %963 = vmatprep.subr.mxu0 0.0
    %964 = vmatpush1.msra.mxu0 0.0
    %965 = vmatprep.subr.mxu0 0.0
    %966 = vmatpush1.msra.mxu0 0.0
    %967 = vmatprep.subr.mxu0 0.0
    %968 = vmatpush1.msra.mxu0 0.0
    %969 = vmatprep.subr.mxu0 0.0
    %970 = vmatpush1.msra.mxu0 0.0
    %971 = vmatprep.subr.mxu0 0.0
    %972 = vmatpush1.msra.mxu0 0.0
    %973 = vmatprep.subr.mxu0 0.0
    %974 = vmatpush1.msra.mxu0 0.0
    %975 = vmatprep.subr.mxu0 0.0
    %976 = vmatpush1.msra.mxu0 0.0
    %977 = vmatprep.subr.mxu0 0.0
    %978 = vmatpush1.msra.mxu0 0.0
    %979 = vmatprep.subr.mxu0 0.0
    %980 = vmatpush1.msra.mxu0 0.0
    %981 = vmatprep.subr.mxu0 0.0
    %982 = vmatpush1.msra.mxu0 0.0
    %983 = vmatprep.subr.mxu0 0.0
    %984 = vmatpush1.msra.mxu0 0.0
    %985 = vmatprep.subr.mxu0 0.0
    %986 = vmatpush1.msra.mxu0 0.0
    %987 = vmatprep.subr.mxu0 0.0
    %988 = vmatpush1.msra.mxu0 0.0
    %989 = vmatprep.subr.mxu0 0.0
    %990 = vmatpush1.msra.mxu0 0.0
    %991 = vmatprep.subr.mxu0 0.0
    %992 = vmatpush1.msra.mxu0 0.0
    %993 = vmatprep.subr.mxu0 0.0
    %994 = vmatpush1.msra.mxu0 0.0
    %995 = vmatprep.subr.mxu0 0.0
    %996 = vmatpush1.msra.mxu0 0.0
    %997 = vmatprep.subr.mxu0 0.0
    %998 = vmatpush1.msra.mxu0 0.0
    %999 = vmatprep.subr.mxu0 0.0
    %1000 = vmatpush1.msra.mxu0 0.0
    %1001 = vmatprep.mubr.f32.mxu0 0.0
    %v1002 = vand.u32 %v700, 4294901760
    %v1003 = vsub.f32 %v700, %v1002
    %1004 = vmatmul.mubr.f32.gmra.mrb[0].mxu0 %v1003
    %v1005 = vpop.f32.mrb[0].mxu0
    %v1006 = vadd.f32 %v908, %v1005
    %v1007 = vpop.f32.mrb[0].mxu0
    %1008 = vmatprep.mubr.f32.mxu0 0.0
    %v1009 = vand.u32 %v703, 4294901760
    %v1010 = vsub.f32 %v703, %v1009
    %1011 = vmatmul.mubr.f32.gmra.mrb[0].mxu0 %v1010
    %v1012 = vpop.f32.mrb[0].mxu0
    %v1013 = vadd.f32 %v914, %v1012
    %v1014 = vpop.f32.mrb[0].mxu0
    %1015 = vmatprep.mubr.f32.mxu0 0.0
    %v1016 = vand.u32 %v706, 4294901760
    %v1017 = vsub.f32 %v706, %v1016
    %1018 = vmatmul.mubr.f32.gmra.mrb[0].mxu0 %v1017
    %v1019 = vpop.f32.mrb[0].mxu0
    %v1020 = vadd.f32 %v920, %v1019
    %v1021 = vpop.f32.mrb[0].mxu0
    %1022 = vmatprep.mubr.f32.mxu0 0.0
    %v1023 = vand.u32 %v709, 4294901760
    %v1024 = vsub.f32 %v709, %v1023
    %1025 = vmatmul.mubr.f32.gmra.mrb[0].mxu0 %v1024
    %v1026 = vpop.f32.mrb[0].mxu0
    %v1027 = vadd.f32 %v926, %v1026
    %v1028 = vpop.f32.mrb[0].mxu0
    %1029 = vdwg.mxu0
    %1030 = vmatprep.subr.mxu0 0.0
    %v1031 = vand.u32 %v666, 4294901760
    %1032 = vmatpush1.msra.mxu0 %v1031
    %1033 = vmatprep.subr.mxu0 0.0
    %v1034 = vand.u32 %v667, 4294901760
    %1035 = vmatpush1.msra.mxu0 %v1034
    %1036 = vmatprep.subr.mxu0 0.0
    %v1037 = vand.u32 %v668, 4294901760
    %1038 = vmatpush1.msra.mxu0 %v1037
    %1039 = vmatprep.subr.mxu0 0.0
    %v1040 = vand.u32 %v669, 4294901760
    %1041 = vmatpush1.msra.mxu0 %v1040
    %1042 = vmatprep.subr.mxu0 0.0
    %1043 = vmatpush1.msra.mxu0 0.0
    %1044 = vmatprep.subr.mxu0 0.0
    %1045 = vmatpush1.msra.mxu0 0.0
    %1046 = vmatprep.subr.mxu0 0.0
    %1047 = vmatpush1.msra.mxu0 0.0
    %1048 = vmatprep.subr.mxu0 0.0
    %1049 = vmatpush1.msra.mxu0 0.0
    %1050 = vmatprep.subr.mxu0 0.0
    %1051 = vmatpush1.msra.mxu0 0.0
    %1052 = vmatprep.subr.mxu0 0.0
    %1053 = vmatpush1.msra.mxu0 0.0
    %1054 = vmatprep.subr.mxu0 0.0
    %1055 = vmatpush1.msra.mxu0 0.0
    %1056 = vmatprep.subr.mxu0 0.0
    %1057 = vmatpush1.msra.mxu0 0.0
    %1058 = vmatprep.subr.mxu0 0.0
    %1059 = vmatpush1.msra.mxu0 0.0
    %1060 = vmatprep.subr.mxu0 0.0
    %1061 = vmatpush1.msra.mxu0 0.0
    %1062 = vmatprep.subr.mxu0 0.0
    %1063 = vmatpush1.msra.mxu0 0.0
    %1064 = vmatprep.subr.mxu0 0.0
    %1065 = vmatpush1.msra.mxu0 0.0
    %1066 = vmatprep.subr.mxu0 0.0
    %1067 = vmatpush1.msra.mxu0 0.0
    %1068 = vmatprep.subr.mxu0 0.0
    %1069 = vmatpush1.msra.mxu0 0.0
    %1070 = vmatprep.subr.mxu0 0.0
    %1071 = vmatpush1.msra.mxu0 0.0
    %1072 = vmatprep.subr.mxu0 0.0
    %1073 = vmatpush1.msra.mxu0 0.0
    %1074 = vmatprep.subr.mxu0 0.0
    %1075 = vmatpush1.msra.mxu0 0.0
    %1076 = vmatprep.subr.mxu0 0.0
    %1077 = vmatpush1.msra.mxu0 0.0
    %1078 = vmatprep.subr.mxu0 0.0
    %1079 = vmatpush1.msra.mxu0 0.0
    %1080 = vmatprep.subr.mxu0 0.0
    %1081 = vmatpush1.msra.mxu0 0.0
    %1082 = vmatprep.subr.mxu0 0.0
    %1083 = vmatpush1.msra.mxu0 0.0
    %1084 = vmatprep.subr.mxu0 0.0
    %1085 = vmatpush1.msra.mxu0 0.0
    %1086 = vmatprep.subr.mxu0 0.0
    %1087 = vmatpush1.msra.mxu0 0.0
    %1088 = vmatprep.subr.mxu0 0.0
    %1089 = vmatpush1.msra.mxu0 0.0
    %1090 = vmatprep.subr.mxu0 0.0
    %1091 = vmatpush1.msra.mxu0 0.0
    %1092 = vmatprep.subr.mxu0 0.0
    %1093 = vmatpush1.msra.mxu0 0.0
    %1094 = vmatprep.subr.mxu0 0.0
    %1095 = vmatpush1.msra.mxu0 0.0
    %1096 = vmatprep.subr.mxu0 0.0
    %1097 = vmatpush1.msra.mxu0 0.0
    %1098 = vmatprep.mubr.f32.mxu0 0.0
    %v1099 = vand.u32 %v700, 4294901760
    %v1100 = vsub.f32 %v700, %v1099
    %v1101 = vand.u32 %v1100, 4294901760
    %1102 = vmatmul.mubr.f32.gmra.mrb[0].mxu0 %v1101
    %v1103 = vpop.f32.mrb[0].mxu0
    %v1104 = vadd.f32 %v1006, %v1103
    %v1105 = vpop.f32.mrb[0].mxu0
    %1106 = vmatprep.mubr.f32.mxu0 0.0
    %v1107 = vand.u32 %v703, 4294901760
    %v1108 = vsub.f32 %v703, %v1107
    %v1109 = vand.u32 %v1108, 4294901760
    %1110 = vmatmul.mubr.f32.gmra.mrb[0].mxu0 %v1109
    %v1111 = vpop.f32.mrb[0].mxu0
    %v1112 = vadd.f32 %v1013, %v1111
    %v1113 = vpop.f32.mrb[0].mxu0
    %1114 = vmatprep.mubr.f32.mxu0 0.0
    %v1115 = vand.u32 %v706, 4294901760
    %v1116 = vsub.f32 %v706, %v1115
    %v1117 = vand.u32 %v1116, 4294901760
    %1118 = vmatmul.mubr.f32.gmra.mrb[0].mxu0 %v1117
    %v1119 = vpop.f32.mrb[0].mxu0
    %v1120 = vadd.f32 %v1020, %v1119
    %v1121 = vpop.f32.mrb[0].mxu0
    %1122 = vmatprep.mubr.f32.mxu0 0.0
    %v1123 = vand.u32 %v709, 4294901760
    %v1124 = vsub.f32 %v709, %v1123
    %v1125 = vand.u32 %v1124, 4294901760
    %1126 = vmatmul.mubr.f32.gmra.mrb[0].mxu0 %v1125
    %v1127 = vpop.f32.mrb[0].mxu0
    %v1128 = vadd.f32 %v1027, %v1127
    %v1129 = vpop.f32.mrb[0].mxu0
    %1130 = vdwg.mxu0
    %1131 = vmatprep.subr.mxu0 0.0
    %v1132 = vand.u32 %v666, 4294901760
    %v1133 = vsub.f32 %v666, %v1132
    %v1134 = vand.u32 %v1133, 4294901760
    %1135 = vmatpush1.msra.mxu0 %v1134
    %1136 = vmatprep.subr.mxu0 0.0
    %v1137 = vand.u32 %v667, 4294901760
    %v1138 = vsub.f32 %v667, %v1137
    %v1139 = vand.u32 %v1138, 4294901760
    %1140 = vmatpush1.msra.mxu0 %v1139
    %1141 = vmatprep.subr.mxu0 0.0
    %v1142 = vand.u32 %v668, 4294901760
    %v1143 = vsub.f32 %v668, %v1142
    %v1144 = vand.u32 %v1143, 4294901760
    %1145 = vmatpush1.msra.mxu0 %v1144
    %1146 = vmatprep.subr.mxu0 0.0
    %v1147 = vand.u32 %v669, 4294901760
    %v1148 = vsub.f32 %v669, %v1147
    %v1149 = vand.u32 %v1148, 4294901760
    %1150 = vmatpush1.msra.mxu0 %v1149
    %1151 = vmatprep.subr.mxu0 0.0
    %1152 = vmatpush1.msra.mxu0 0.0
    %1153 = vmatprep.subr.mxu0 0.0
    %1154 = vmatpush1.msra.mxu0 0.0
    %1155 = vmatprep.subr.mxu0 0.0
    %1156 = vmatpush1.msra.mxu0 0.0
    %1157 = vmatprep.subr.mxu0 0.0
    %1158 = vmatpush1.msra.mxu0 0.0
    %1159 = vmatprep.subr.mxu0 0.0
    %1160 = vmatpush1.msra.mxu0 0.0
    %1161 = vmatprep.subr.mxu0 0.0
    %1162 = vmatpush1.msra.mxu0 0.0
    %1163 = vmatprep.subr.mxu0 0.0
    %1164 = vmatpush1.msra.mxu0 0.0
    %1165 = vmatprep.subr.mxu0 0.0
    %1166 = vmatpush1.msra.mxu0 0.0
    %1167 = vmatprep.subr.mxu0 0.0
    %1168 = vmatpush1.msra.mxu0 0.0
    %1169 = vmatprep.subr.mxu0 0.0
    %1170 = vmatpush1.msra.mxu0 0.0
    %1171 = vmatprep.subr.mxu0 0.0
    %1172 = vmatpush1.msra.mxu0 0.0
    %1173 = vmatprep.subr.mxu0 0.0
    %1174 = vmatpush1.msra.mxu0 0.0
    %1175 = vmatprep.subr.mxu0 0.0
    %1176 = vmatpush1.msra.mxu0 0.0
    %1177 = vmatprep.subr.mxu0 0.0
    %1178 = vmatpush1.msra.mxu0 0.0
    %1179 = vmatprep.subr.mxu0 0.0
    %1180 = vmatpush1.msra.mxu0 0.0
    %1181 = vmatprep.subr.mxu0 0.0
    %1182 = vmatpush1.msra.mxu0 0.0
    %1183 = vmatprep.subr.mxu0 0.0
    %1184 = vmatpush1.msra.mxu0 0.0
    %1185 = vmatprep.subr.mxu0 0.0
    %1186 = vmatpush1.msra.mxu0 0.0
    %1187 = vmatprep.subr.mxu0 0.0
    %1188 = vmatpush1.msra.mxu0 0.0
    %1189 = vmatprep.subr.mxu0 0.0
    %1190 = vmatpush1.msra.mxu0 0.0
    %1191 = vmatprep.subr.mxu0 0.0
    %1192 = vmatpush1.msra.mxu0 0.0
    %1193 = vmatprep.subr.mxu0 0.0
    %1194 = vmatpush1.msra.mxu0 0.0
    %1195 = vmatprep.subr.mxu0 0.0
    %1196 = vmatpush1.msra.mxu0 0.0
    %1197 = vmatprep.subr.mxu0 0.0
    %1198 = vmatpush1.msra.mxu0 0.0
    %1199 = vmatprep.subr.mxu0 0.0
    %1200 = vmatpush1.msra.mxu0 0.0
    %1201 = vmatprep.subr.mxu0 0.0
    %1202 = vmatpush1.msra.mxu0 0.0
    %1203 = vmatprep.subr.mxu0 0.0
    %1204 = vmatpush1.msra.mxu0 0.0
    %1205 = vmatprep.subr.mxu0 0.0
    %1206 = vmatpush1.msra.mxu0 0.0
    %1207 = vmatprep.mubr.f32.mxu0 0.0
    %v1208 = vand.u32 %v700, 4294901760
    %1209 = vmatmul.mubr.f32.gmra.mrb[0].mxu0 %v1208
    %v1210 = vpop.f32.mrb[0].mxu0
    %v1211 = vadd.f32 %v1104, %v1210
    %v1212 = vpop.f32.mrb[0].mxu0
    %1213 = vmatprep.mubr.f32.mxu0 0.0
    %v1214 = vand.u32 %v703, 4294901760
    %1215 = vmatmul.mubr.f32.gmra.mrb[0].mxu0 %v1214
    %v1216 = vpop.f32.mrb[0].mxu0
    %v1217 = vadd.f32 %v1112, %v1216
    %v1218 = vpop.f32.mrb[0].mxu0
    %1219 = vmatprep.mubr.f32.mxu0 0.0
    %v1220 = vand.u32 %v706, 4294901760
    %1221 = vmatmul.mubr.f32.gmra.mrb[0].mxu0 %v1220
    %v1222 = vpop.f32.mrb[0].mxu0
    %v1223 = vadd.f32 %v1120, %v1222
    %v1224 = vpop.f32.mrb[0].mxu0
    %1225 = vmatprep.mubr.f32.mxu0 0.0
    %v1226 = vand.u32 %v709, 4294901760
    %1227 = vmatmul.mubr.f32.gmra.mrb[0].mxu0 %v1226
    %v1228 = vpop.f32.mrb[0].mxu0
    %v1229 = vadd.f32 %v1128, %v1228
    %v1230 = vpop.f32.mrb[0].mxu0
    %1231 = vdwg.mxu0
    %1232 = vmatprep.subr.mxu0 0.0
    %v1233 = vand.u32 %v666, 4294901760
    %1234 = vmatpush1.msra.mxu0 %v1233
    %1235 = vmatprep.subr.mxu0 0.0
    %v1236 = vand.u32 %v667, 4294901760
    %1237 = vmatpush1.msra.mxu0 %v1236
    %1238 = vmatprep.subr.mxu0 0.0
    %v1239 = vand.u32 %v668, 4294901760
    %1240 = vmatpush1.msra.mxu0 %v1239
    %1241 = vmatprep.subr.mxu0 0.0
    %v1242 = vand.u32 %v669, 4294901760
    %1243 = vmatpush1.msra.mxu0 %v1242
    %1244 = vmatprep.subr.mxu0 0.0
    %1245 = vmatpush1.msra.mxu0 0.0
    %1246 = vmatprep.subr.mxu0 0.0
    %1247 = vmatpush1.msra.mxu0 0.0
    %1248 = vmatprep.subr.mxu0 0.0
    %1249 = vmatpush1.msra.mxu0 0.0
    %1250 = vmatprep.subr.mxu0 0.0
    %1251 = vmatpush1.msra.mxu0 0.0
    %1252 = vmatprep.subr.mxu0 0.0
    %1253 = vmatpush1.msra.mxu0 0.0
    %1254 = vmatprep.subr.mxu0 0.0
    %1255 = vmatpush1.msra.mxu0 0.0
    %1256 = vmatprep.subr.mxu0 0.0
    %1257 = vmatpush1.msra.mxu0 0.0
    %1258 = vmatprep.subr.mxu0 0.0
    %1259 = vmatpush1.msra.mxu0 0.0
    %1260 = vmatprep.subr.mxu0 0.0
    %1261 = vmatpush1.msra.mxu0 0.0
    %1262 = vmatprep.subr.mxu0 0.0
    %1263 = vmatpush1.msra.mxu0 0.0
    %1264 = vmatprep.subr.mxu0 0.0
    %1265 = vmatpush1.msra.mxu0 0.0
    %1266 = vmatprep.subr.mxu0 0.0
    %1267 = vmatpush1.msra.mxu0 0.0
    %1268 = vmatprep.subr.mxu0 0.0
    %1269 = vmatpush1.msra.mxu0 0.0
    %1270 = vmatprep.subr.mxu0 0.0
    %1271 = vmatpush1.msra.mxu0 0.0
    %1272 = vmatprep.subr.mxu0 0.0
    %1273 = vmatpush1.msra.mxu0 0.0
    %1274 = vmatprep.subr.mxu0 0.0
    %1275 = vmatpush1.msra.mxu0 0.0
    %1276 = vmatprep.subr.mxu0 0.0
    %1277 = vmatpush1.msra.mxu0 0.0
    %1278 = vmatprep.subr.mxu0 0.0
    %1279 = vmatpush1.msra.mxu0 0.0
    %1280 = vmatprep.subr.mxu0 0.0
    %1281 = vmatpush1.msra.mxu0 0.0
    %1282 = vmatprep.subr.mxu0 0.0
    %1283 = vmatpush1.msra.mxu0 0.0
    %1284 = vmatprep.subr.mxu0 0.0
    %1285 = vmatpush1.msra.mxu0 0.0
    %1286 = vmatprep.subr.mxu0 0.0
    %1287 = vmatpush1.msra.mxu0 0.0
    %1288 = vmatprep.subr.mxu0 0.0
    %1289 = vmatpush1.msra.mxu0 0.0
    %1290 = vmatprep.subr.mxu0 0.0
    %1291 = vmatpush1.msra.mxu0 0.0
    %1292 = vmatprep.subr.mxu0 0.0
    %1293 = vmatpush1.msra.mxu0 0.0
    %1294 = vmatprep.subr.mxu0 0.0
    %1295 = vmatpush1.msra.mxu0 0.0
    %1296 = vmatprep.subr.mxu0 0.0
    %1297 = vmatpush1.msra.mxu0 0.0
    %1298 = vmatprep.subr.mxu0 0.0
    %1299 = vmatpush1.msra.mxu0 0.0
    %1300 = vmatprep.mubr.f32.mxu0 0.0
    %v1301 = vand.u32 %v700, 4294901760
    %1302 = vmatmul.mubr.f32.gmra.mrb[0].mxu0 %v1301
    %v1303 = vpop.f32.mrb[0].mxu0
    %v1304 = vadd.f32 %v1211, %v1303
    %v1305 = vpop.f32.mrb[0].mxu0
    %1306 = vmatprep.mubr.f32.mxu0 0.0
    %v1307 = vand.u32 %v703, 4294901760
    %1308 = vmatmul.mubr.f32.gmra.mrb[0].mxu0 %v1307
    %v1309 = vpop.f32.mrb[0].mxu0
    %v1310 = vadd.f32 %v1217, %v1309
    %v1311 = vpop.f32.mrb[0].mxu0
    %1312 = vmatprep.mubr.f32.mxu0 0.0
    %v1313 = vand.u32 %v706, 4294901760
    %1314 = vmatmul.mubr.f32.gmra.mrb[0].mxu0 %v1313
    %v1315 = vpop.f32.mrb[0].mxu0
    %v1316 = vadd.f32 %v1223, %v1315
    %v1317 = vpop.f32.mrb[0].mxu0
    %1318 = vmatprep.mubr.f32.mxu0 0.0
    %v1319 = vand.u32 %v709, 4294901760
    %1320 = vmatmul.mubr.f32.gmra.mrb[0].mxu0 %v1319
    %v1321 = vpop.f32.mrb[0].mxu0
    %v1322 = vadd.f32 %v1229, %v1321
    %v1323 = vpop.f32.mrb[0].mxu0
    %1324 = vdwg.mxu0
    %v1325 = vtanh.pop %v1304
    %v1326 = vtanh.pop %v1310
    %v1327 = vtanh.pop %v1316
    %v1328 = vtanh.pop %v1322
    %v1329 = vld [vmem:[%s5] sm:$0xff]
    %v1330 = vld [vmem:[%s5 + $0x8] sm:$0xff]
    %v1331 = vld [vmem:[%s5 + $0x10] sm:$0xff]
    %v1332 = vld [vmem:[%s5 + $0x18] sm:$0xff]
    %v1333 = vld [vmem:[%s6] sm:$0xff]
    %v1334 = vld [vmem:[%s6 + $0x8] sm:$0xff]
    %v1335 = vld [vmem:[%s6 + $0x10] sm:$0xff]
    %v1336 = vld [vmem:[%s6 + $0x18] sm:$0xff]
    %1338 = vset.pattern.permute.xlu0 0
    %1339 = vperm.xlu0 %1338, %v1333
    %v1340 = vpop.permute.xlu0 %1339
    %1343 = vset.pattern.permute.xlu0 0
    %1344 = vperm.xlu0 %1343, %v1334
    %v1345 = vpop.permute.xlu0 %1344
    %1348 = vset.pattern.permute.xlu0 0
    %1349 = vperm.xlu0 %1348, %v1335
    %v1350 = vpop.permute.xlu0 %1349
    %1353 = vset.pattern.permute.xlu0 0
    %1354 = vperm.xlu0 %1353, %v1336
    %v1355 = vpop.permute.xlu0 %1354
    %v1358 = vsel %vm698, %v1329, 0
    %v1361 = vsel %vm698, %v1330, 0
    %v1364 = vsel %vm698, %v1331, 0
    %v1367 = vsel %vm698, %v1332, 0
    %1369 = vmatprep.subr.mxu0 0.0
    %v1370 = vand.u32 %v1325, 4294901760
    %1371 = vmatpush1.msra.mxu0 %v1370
    %1372 = vmatprep.subr.mxu0 0.0
    %v1373 = vand.u32 %v1326, 4294901760
    %1374 = vmatpush1.msra.mxu0 %v1373
    %1375 = vmatprep.subr.mxu0 0.0
    %v1376 = vand.u32 %v1327, 4294901760
    %1377 = vmatpush1.msra.mxu0 %v1376
    %1378 = vmatprep.subr.mxu0 0.0
    %v1379 = vand.u32 %v1328, 4294901760
    %1380 = vmatpush1.msra.mxu0 %v1379
    %1381 = vmatprep.subr.mxu0 0.0
    %1382 = vmatpush1.msra.mxu0 0.0
    %1383 = vmatprep.subr.mxu0 0.0
    %1384 = vmatpush1.msra.mxu0 0.0
    %1385 = vmatprep.subr.mxu0 0.0
    %1386 = vmatpush1.msra.mxu0 0.0
    %1387 = vmatprep.subr.mxu0 0.0
    %1388 = vmatpush1.msra.mxu0 0.0
    %1389 = vmatprep.subr.mxu0 0.0
    %1390 = vmatpush1.msra.mxu0 0.0
    %1391 = vmatprep.subr.mxu0 0.0
    %1392 = vmatpush1.msra.mxu0 0.0
    %1393 = vmatprep.subr.mxu0 0.0
    %1394 = vmatpush1.msra.mxu0 0.0
    %1395 = vmatprep.subr.mxu0 0.0
    %1396 = vmatpush1.msra.mxu0 0.0
    %1397 = vmatprep.subr.mxu0 0.0
    %1398 = vmatpush1.msra.mxu0 0.0
    %1399 = vmatprep.subr.mxu0 0.0
    %1400 = vmatpush1.msra.mxu0 0.0
    %1401 = vmatprep.subr.mxu0 0.0
    %1402 = vmatpush1.msra.mxu0 0.0
    %1403 = vmatprep.subr.mxu0 0.0
    %1404 = vmatpush1.msra.mxu0 0.0
    %1405 = vmatprep.subr.mxu0 0.0
    %1406 = vmatpush1.msra.mxu0 0.0
    %1407 = vmatprep.subr.mxu0 0.0
    %1408 = vmatpush1.msra.mxu0 0.0
    %1409 = vmatprep.subr.mxu0 0.0
    %1410 = vmatpush1.msra.mxu0 0.0
    %1411 = vmatprep.subr.mxu0 0.0
    %1412 = vmatpush1.msra.mxu0 0.0
    %1413 = vmatprep.subr.mxu0 0.0
    %1414 = vmatpush1.msra.mxu0 0.0
    %1415 = vmatprep.subr.mxu0 0.0
    %1416 = vmatpush1.msra.mxu0 0.0
    %1417 = vmatprep.subr.mxu0 0.0
    %1418 = vmatpush1.msra.mxu0 0.0
    %1419 = vmatprep.subr.mxu0 0.0
    %1420 = vmatpush1.msra.mxu0 0.0
    %1421 = vmatprep.subr.mxu0 0.0
    %1422 = vmatpush1.msra.mxu0 0.0
    %1423 = vmatprep.subr.mxu0 0.0
    %1424 = vmatpush1.msra.mxu0 0.0
    %1425 = vmatprep.subr.mxu0 0.0
    %1426 = vmatpush1.msra.mxu0 0.0
    %1427 = vmatprep.subr.mxu0 0.0
    %1428 = vmatpush1.msra.mxu0 0.0
    %1429 = vmatprep.subr.mxu0 0.0
    %1430 = vmatpush1.msra.mxu0 0.0
    %1431 = vmatprep.subr.mxu0 0.0
    %1432 = vmatpush1.msra.mxu0 0.0
    %1433 = vmatprep.subr.mxu0 0.0
    %1434 = vmatpush1.msra.mxu0 0.0
    %1435 = vmatprep.subr.mxu0 0.0
    %1436 = vmatpush1.msra.mxu0 0.0
    %1437 = vmatprep.mubr.f32.mxu0 0.0
    %v1438 = vand.u32 %v1358, 4294901760
    %v1439 = vsub.f32 %v1358, %v1438
    %v1440 = vand.u32 %v1439, 4294901760
    %v1441 = vsub.f32 %v1439, %v1440
    %v1442 = vand.u32 %v1441, 4294901760
    %1443 = vmatmul.mubr.f32.gmra.mrb[0].mxu0 %v1442
    %v1444 = vpop.f32.mrb[0].mxu0
    %v1445 = vadd.f32 %v1340, %v1444
    %v1446 = vpop.f32.mrb[0].mxu0
    %1447 = vmatprep.mubr.f32.mxu0 0.0
    %v1448 = vand.u32 %v1361, 4294901760
    %v1449 = vsub.f32 %v1361, %v1448
    %v1450 = vand.u32 %v1449, 4294901760
    %v1451 = vsub.f32 %v1449, %v1450
    %v1452 = vand.u32 %v1451, 4294901760
    %1453 = vmatmul.mubr.f32.gmra.mrb[0].mxu0 %v1452
    %v1454 = vpop.f32.mrb[0].mxu0
    %v1455 = vadd.f32 %v1345, %v1454
    %v1456 = vpop.f32.mrb[0].mxu0
    %1457 = vmatprep.mubr.f32.mxu0 0.0
    %v1458 = vand.u32 %v1364, 4294901760
    %v1459 = vsub.f32 %v1364, %v1458
    %v1460 = vand.u32 %v1459, 4294901760
    %v1461 = vsub.f32 %v1459, %v1460
    %v1462 = vand.u32 %v1461, 4294901760
    %1463 = vmatmul.mubr.f32.gmra.mrb[0].mxu0 %v1462
    %v1464 = vpop.f32.mrb[0].mxu0
    %v1465 = vadd.f32 %v1350, %v1464
    %v1466 = vpop.f32.mrb[0].mxu0
    %1467 = vmatprep.mubr.f32.mxu0 0.0
    %v1468 = vand.u32 %v1367, 4294901760
    %v1469 = vsub.f32 %v1367, %v1468
    %v1470 = vand.u32 %v1469, 4294901760
    %v1471 = vsub.f32 %v1469, %v1470
    %v1472 = vand.u32 %v1471, 4294901760
    %1473 = vmatmul.mubr.f32.gmra.mrb[0].mxu0 %v1472
    %v1474 = vpop.f32.mrb[0].mxu0
    %v1475 = vadd.f32 %v1355, %v1474
    %v1476 = vpop.f32.mrb[0].mxu0
    %1477 = vdwg.mxu0
    %1478 = vmatprep.subr.mxu0 0.0
    %v1479 = vand.u32 %v1325, 4294901760
    %v1480 = vsub.f32 %v1325, %v1479
    %v1481 = vand.u32 %v1480, 4294901760
    %v1482 = vsub.f32 %v1480, %v1481
    %v1483 = vand.u32 %v1482, 4294901760
    %1484 = vmatpush1.msra.mxu0 %v1483
    %1485 = vmatprep.subr.mxu0 0.0
    %v1486 = vand.u32 %v1326, 4294901760
    %v1487 = vsub.f32 %v1326, %v1486
    %v1488 = vand.u32 %v1487, 4294901760
    %v1489 = vsub.f32 %v1487, %v1488
    %v1490 = vand.u32 %v1489, 4294901760
    %1491 = vmatpush1.msra.mxu0 %v1490
    %1492 = vmatprep.subr.mxu0 0.0
    %v1493 = vand.u32 %v1327, 4294901760
    %v1494 = vsub.f32 %v1327, %v1493
    %v1495 = vand.u32 %v1494, 4294901760
    %v1496 = vsub.f32 %v1494, %v1495
    %v1497 = vand.u32 %v1496, 4294901760
    %1498 = vmatpush1.msra.mxu0 %v1497
    %1499 = vmatprep.subr.mxu0 0.0
    %v1500 = vand.u32 %v1328, 4294901760
    %v1501 = vsub.f32 %v1328, %v1500
    %v1502 = vand.u32 %v1501, 4294901760
    %v1503 = vsub.f32 %v1501, %v1502
    %v1504 = vand.u32 %v1503, 4294901760
    %1505 = vmatpush1.msra.mxu0 %v1504
    %1506 = vmatprep.subr.mxu0 0.0
    %1507 = vmatpush1.msra.mxu0 0.0
    %1508 = vmatprep.subr.mxu0 0.0
    %1509 = vmatpush1.msra.mxu0 0.0
    %1510 = vmatprep.subr.mxu0 0.0
    %1511 = vmatpush1.msra.mxu0 0.0
    %1512 = vmatprep.subr.mxu0 0.0
    %1513 = vmatpush1.msra.mxu0 0.0
    %1514 = vmatprep.subr.mxu0 0.0
    %1515 = vmatpush1.msra.mxu0 0.0
    %1516 = vmatprep.subr.mxu0 0.0
    %1517 = vmatpush1.msra.mxu0 0.0
    %1518 = vmatprep.subr.mxu0 0.0
    %1519 = vmatpush1.msra.mxu0 0.0
    %1520 = vmatprep.subr.mxu0 0.0
    %1521 = vmatpush1.msra.mxu0 0.0
    %1522 = vmatprep.subr.mxu0 0.0
    %1523 = vmatpush1.msra.mxu0 0.0
    %1524 = vmatprep.subr.mxu0 0.0
    %1525 = vmatpush1.msra.mxu0 0.0
    %1526 = vmatprep.subr.mxu0 0.0
    %1527 = vmatpush1.msra.mxu0 0.0
    %1528 = vmatprep.subr.mxu0 0.0
    %1529 = vmatpush1.msra.mxu0 0.0
    %1530 = vmatprep.subr.mxu0 0.0
    %1531 = vmatpush1.msra.mxu0 0.0
    %1532 = vmatprep.subr.mxu0 0.0
    %1533 = vmatpush1.msra.mxu0 0.0
    %1534 = vmatprep.subr.mxu0 0.0
    %1535 = vmatpush1.msra.mxu0 0.0
    %1536 = vmatprep.subr.mxu0 0.0
    %1537 = vmatpush1.msra.mxu0 0.0
    %1538 = vmatprep.subr.mxu0 0.0
    %1539 = vmatpush1.msra.mxu0 0.0
    %1540 = vmatprep.subr.mxu0 0.0
    %1541 = vmatpush1.msra.mxu0 0.0
    %1542 = vmatprep.subr.mxu0 0.0
    %1543 = vmatpush1.msra.mxu0 0.0
    %1544 = vmatprep.subr.mxu0 0.0
    %1545 = vmatpush1.msra.mxu0 0.0
    %1546 = vmatprep.subr.mxu0 0.0
    %1547 = vmatpush1.msra.mxu0 0.0
    %1548 = vmatprep.subr.mxu0 0.0
    %1549 = vmatpush1.msra.mxu0 0.0
    %1550 = vmatprep.subr.mxu0 0.0
    %1551 = vmatpush1.msra.mxu0 0.0
    %1552 = vmatprep.subr.mxu0 0.0
    %1553 = vmatpush1.msra.mxu0 0.0
    %1554 = vmatprep.subr.mxu0 0.0
    %1555 = vmatpush1.msra.mxu0 0.0
    %1556 = vmatprep.subr.mxu0 0.0
    %1557 = vmatpush1.msra.mxu0 0.0
    %1558 = vmatprep.subr.mxu0 0.0
    %1559 = vmatpush1.msra.mxu0 0.0
    %1560 = vmatprep.subr.mxu0 0.0
    %1561 = vmatpush1.msra.mxu0 0.0
    %1562 = vmatprep.mubr.f32.mxu0 0.0
    %v1563 = vand.u32 %v1358, 4294901760
    %1564 = vmatmul.mubr.f32.gmra.mrb[0].mxu0 %v1563
    %v1565 = vpop.f32.mrb[0].mxu0
    %v1566 = vadd.f32 %v1445, %v1565
    %v1567 = vpop.f32.mrb[0].mxu0
    %1568 = vmatprep.mubr.f32.mxu0 0.0
    %v1569 = vand.u32 %v1361, 4294901760
    %1570 = vmatmul.mubr.f32.gmra.mrb[0].mxu0 %v1569
    %v1571 = vpop.f32.mrb[0].mxu0
    %v1572 = vadd.f32 %v1455, %v1571
    %v1573 = vpop.f32.mrb[0].mxu0
    %1574 = vmatprep.mubr.f32.mxu0 0.0
    %v1575 = vand.u32 %v1364, 4294901760
    %1576 = vmatmul.mubr.f32.gmra.mrb[0].mxu0 %v1575
    %v1577 = vpop.f32.mrb[0].mxu0
    %v1578 = vadd.f32 %v1465, %v1577
    %v1579 = vpop.f32.mrb[0].mxu0
    %1580 = vmatprep.mubr.f32.mxu0 0.0
    %v1581 = vand.u32 %v1367, 4294901760
    %1582 = vmatmul.mubr.f32.gmra.mrb[0].mxu0 %v1581
    %v1583 = vpop.f32.mrb[0].mxu0
    %v1584 = vadd.f32 %v1475, %v1583
    %v1585 = vpop.f32.mrb[0].mxu0
    %1586 = vdwg.mxu0
    %1587 = vmatprep.subr.mxu0 0.0
    %v1588 = vand.u32 %v1325, 4294901760
    %v1589 = vsub.f32 %v1325, %v1588
    %1590 = vmatpush1.msra.mxu0 %v1589
    %1591 = vmatprep.subr.mxu0 0.0
    %v1592 = vand.u32 %v1326, 4294901760
    %v1593 = vsub.f32 %v1326, %v1592
    %1594 = vmatpush1.msra.mxu0 %v1593
    %1595 = vmatprep.subr.mxu0 0.0
    %v1596 = vand.u32 %v1327, 4294901760
    %v1597 = vsub.f32 %v1327, %v1596
    %1598 = vmatpush1.msra.mxu0 %v1597
    %1599 = vmatprep.subr.mxu0 0.0
    %v1600 = vand.u32 %v1328, 4294901760
    %v1601 = vsub.f32 %v1328, %v1600
    %1602 = vmatpush1.msra.mxu0 %v1601
    %1603 = vmatprep.subr.mxu0 0.0
    %1604 = vmatpush1.msra.mxu0 0.0
    %1605 = vmatprep.subr.mxu0 0.0
    %1606 = vmatpush1.msra.mxu0 0.0
    %1607 = vmatprep.subr.mxu0 0.0
    %1608 = vmatpush1.msra.mxu0 0.0
    %1609 = vmatprep.subr.mxu0 0.0
    %1610 = vmatpush1.msra.mxu0 0.0
    %1611 = vmatprep.subr.mxu0 0.0
    %1612 = vmatpush1.msra.mxu0 0.0
    %1613 = vmatprep.subr.mxu0 0.0
    %1614 = vmatpush1.msra.mxu0 0.0
    %1615 = vmatprep.subr.mxu0 0.0
    %1616 = vmatpush1.msra.mxu0 0.0
    %1617 = vmatprep.subr.mxu0 0.0
    %1618 = vmatpush1.msra.mxu0 0.0
    %1619 = vmatprep.subr.mxu0 0.0
    %1620 = vmatpush1.msra.mxu0 0.0
    %1621 = vmatprep.subr.mxu0 0.0
    %1622 = vmatpush1.msra.mxu0 0.0
    %1623 = vmatprep.subr.mxu0 0.0
    %1624 = vmatpush1.msra.mxu0 0.0
    %1625 = vmatprep.subr.mxu0 0.0
    %1626 = vmatpush1.msra.mxu0 0.0
    %1627 = vmatprep.subr.mxu0 0.0
    %1628 = vmatpush1.msra.mxu0 0.0
    %1629 = vmatprep.subr.mxu0 0.0
    %1630 = vmatpush1.msra.mxu0 0.0
    %1631 = vmatprep.subr.mxu0 0.0
    %1632 = vmatpush1.msra.mxu0 0.0
    %1633 = vmatprep.subr.mxu0 0.0
    %1634 = vmatpush1.msra.mxu0 0.0
    %1635 = vmatprep.subr.mxu0 0.0
    %1636 = vmatpush1.msra.mxu0 0.0
    %1637 = vmatprep.subr.mxu0 0.0
    %1638 = vmatpush1.msra.mxu0 0.0
    %1639 = vmatprep.subr.mxu0 0.0
    %1640 = vmatpush1.msra.mxu0 0.0
    %1641 = vmatprep.subr.mxu0 0.0
    %1642 = vmatpush1.msra.mxu0 0.0
    %1643 = vmatprep.subr.mxu0 0.0
    %1644 = vmatpush1.msra.mxu0 0.0
    %1645 = vmatprep.subr.mxu0 0.0
    %1646 = vmatpush1.msra.mxu0 0.0
    %1647 = vmatprep.subr.mxu0 0.0
    %1648 = vmatpush1.msra.mxu0 0.0
    %1649 = vmatprep.subr.mxu0 0.0
    %1650 = vmatpush1.msra.mxu0 0.0
    %1651 = vmatprep.subr.mxu0 0.0
    %1652 = vmatpush1.msra.mxu0 0.0
    %1653 = vmatprep.subr.mxu0 0.0
    %1654 = vmatpush1.msra.mxu0 0.0
    %1655 = vmatprep.subr.mxu0 0.0
    %1656 = vmatpush1.msra.mxu0 0.0
    %1657 = vmatprep.subr.mxu0 0.0
    %1658 = vmatpush1.msra.mxu0 0.0
    %1659 = vmatprep.mubr.f32.mxu0 0.0
    %v1660 = vand.u32 %v1358, 4294901760
    %v1661 = vsub.f32 %v1358, %v1660
    %1662 = vmatmul.mubr.f32.gmra.mrb[0].mxu0 %v1661
    %v1663 = vpop.f32.mrb[0].mxu0
    %v1664 = vadd.f32 %v1566, %v1663
    %v1665 = vpop.f32.mrb[0].mxu0
    %1666 = vmatprep.mubr.f32.mxu0 0.0
    %v1667 = vand.u32 %v1361, 4294901760
    %v1668 = vsub.f32 %v1361, %v1667
    %1669 = vmatmul.mubr.f32.gmra.mrb[0].mxu0 %v1668
    %v1670 = vpop.f32.mrb[0].mxu0
    %v1671 = vadd.f32 %v1572, %v1670
    %v1672 = vpop.f32.mrb[0].mxu0
    %1673 = vmatprep.mubr.f32.mxu0 0.0
    %v1674 = vand.u32 %v1364, 4294901760
    %v1675 = vsub.f32 %v1364, %v1674
    %1676 = vmatmul.mubr.f32.gmra.mrb[0].mxu0 %v1675
    %v1677 = vpop.f32.mrb[0].mxu0
    %v1678 = vadd.f32 %v1578, %v1677
    %v1679 = vpop.f32.mrb[0].mxu0
    %1680 = vmatprep.mubr.f32.mxu0 0.0
    %v1681 = vand.u32 %v1367, 4294901760
    %v1682 = vsub.f32 %v1367, %v1681
    %1683 = vmatmul.mubr.f32.gmra.mrb[0].mxu0 %v1682
    %v1684 = vpop.f32.mrb[0].mxu0
    %v1685 = vadd.f32 %v1584, %v1684
    %v1686 = vpop.f32.mrb[0].mxu0
    %1687 = vdwg.mxu0
    %1688 = vmatprep.subr.mxu0 0.0
    %v1689 = vand.u32 %v1325, 4294901760
    %1690 = vmatpush1.msra.mxu0 %v1689
    %1691 = vmatprep.subr.mxu0 0.0
    %v1692 = vand.u32 %v1326, 4294901760
    %1693 = vmatpush1.msra.mxu0 %v1692
    %1694 = vmatprep.subr.mxu0 0.0
    %v1695 = vand.u32 %v1327, 4294901760
    %1696 = vmatpush1.msra.mxu0 %v1695
    %1697 = vmatprep.subr.mxu0 0.0
    %v1698 = vand.u32 %v1328, 4294901760
    %1699 = vmatpush1.msra.mxu0 %v1698
    %1700 = vmatprep.subr.mxu0 0.0
    %1701 = vmatpush1.msra.mxu0 0.0
    %1702 = vmatprep.subr.mxu0 0.0
    %1703 = vmatpush1.msra.mxu0 0.0
    %1704 = vmatprep.subr.mxu0 0.0
    %1705 = vmatpush1.msra.mxu0 0.0
    %1706 = vmatprep.subr.mxu0 0.0
    %1707 = vmatpush1.msra.mxu0 0.0
    %1708 = vmatprep.subr.mxu0 0.0
    %1709 = vmatpush1.msra.mxu0 0.0
    %1710 = vmatprep.subr.mxu0 0.0
    %1711 = vmatpush1.msra.mxu0 0.0
    %1712 = vmatprep.subr.mxu0 0.0
    %1713 = vmatpush1.msra.mxu0 0.0
    %1714 = vmatprep.subr.mxu0 0.0
    %1715 = vmatpush1.msra.mxu0 0.0
    %1716 = vmatprep.subr.mxu0 0.0
    %1717 = vmatpush1.msra.mxu0 0.0
    %1718 = vmatprep.subr.mxu0 0.0
    %1719 = vmatpush1.msra.mxu0 0.0
    %1720 = vmatprep.subr.mxu0 0.0
    %1721 = vmatpush1.msra.mxu0 0.0
    %1722 = vmatprep.subr.mxu0 0.0
    %1723 = vmatpush1.msra.mxu0 0.0
    %1724 = vmatprep.subr.mxu0 0.0
    %1725 = vmatpush1.msra.mxu0 0.0
    %1726 = vmatprep.subr.mxu0 0.0
    %1727 = vmatpush1.msra.mxu0 0.0
    %1728 = vmatprep.subr.mxu0 0.0
    %1729 = vmatpush1.msra.mxu0 0.0
    %1730 = vmatprep.subr.mxu0 0.0
    %1731 = vmatpush1.msra.mxu0 0.0
    %1732 = vmatprep.subr.mxu0 0.0
    %1733 = vmatpush1.msra.mxu0 0.0
    %1734 = vmatprep.subr.mxu0 0.0
    %1735 = vmatpush1.msra.mxu0 0.0
    %1736 = vmatprep.subr.mxu0 0.0
    %1737 = vmatpush1.msra.mxu0 0.0
    %1738 = vmatprep.subr.mxu0 0.0
    %1739 = vmatpush1.msra.mxu0 0.0
    %1740 = vmatprep.subr.mxu0 0.0
    %1741 = vmatpush1.msra.mxu0 0.0
    %1742 = vmatprep.subr.mxu0 0.0
    %1743 = vmatpush1.msra.mxu0 0.0
    %1744 = vmatprep.subr.mxu0 0.0
    %1745 = vmatpush1.msra.mxu0 0.0
    %1746 = vmatprep.subr.mxu0 0.0
    %1747 = vmatpush1.msra.mxu0 0.0
    %1748 = vmatprep.subr.mxu0 0.0
    %1749 = vmatpush1.msra.mxu0 0.0
    %1750 = vmatprep.subr.mxu0 0.0
    %1751 = vmatpush1.msra.mxu0 0.0
    %1752 = vmatprep.subr.mxu0 0.0
    %1753 = vmatpush1.msra.mxu0 0.0
    %1754 = vmatprep.subr.mxu0 0.0
    %1755 = vmatpush1.msra.mxu0 0.0
    %1756 = vmatprep.mubr.f32.mxu0 0.0
    %v1757 = vand.u32 %v1358, 4294901760
    %v1758 = vsub.f32 %v1358, %v1757
    %v1759 = vand.u32 %v1758, 4294901760
    %1760 = vmatmul.mubr.f32.gmra.mrb[0].mxu0 %v1759
    %v1761 = vpop.f32.mrb[0].mxu0
    %v1762 = vadd.f32 %v1664, %v1761
    %v1763 = vpop.f32.mrb[0].mxu0
    %1764 = vmatprep.mubr.f32.mxu0 0.0
    %v1765 = vand.u32 %v1361, 4294901760
    %v1766 = vsub.f32 %v1361, %v1765
    %v1767 = vand.u32 %v1766, 4294901760
    %1768 = vmatmul.mubr.f32.gmra.mrb[0].mxu0 %v1767
    %v1769 = vpop.f32.mrb[0].mxu0
    %v1770 = vadd.f32 %v1671, %v1769
    %v1771 = vpop.f32.mrb[0].mxu0
    %1772 = vmatprep.mubr.f32.mxu0 0.0
    %v1773 = vand.u32 %v1364, 4294901760
    %v1774 = vsub.f32 %v1364, %v1773
    %v1775 = vand.u32 %v1774, 4294901760
    %1776 = vmatmul.mubr.f32.gmra.mrb[0].mxu0 %v1775
    %v1777 = vpop.f32.mrb[0].mxu0
    %v1778 = vadd.f32 %v1678, %v1777
    %v1779 = vpop.f32.mrb[0].mxu0
    %1780 = vmatprep.mubr.f32.mxu0 0.0
    %v1781 = vand.u32 %v1367, 4294901760
    %v1782 = vsub.f32 %v1367, %v1781
    %v1783 = vand.u32 %v1782, 4294901760
    %1784 = vmatmul.mubr.f32.gmra.mrb[0].mxu0 %v1783
    %v1785 = vpop.f32.mrb[0].mxu0
    %v1786 = vadd.f32 %v1685, %v1785
    %v1787 = vpop.f32.mrb[0].mxu0
    %1788 = vdwg.mxu0
    %1789 = vmatprep.subr.mxu0 0.0
    %v1790 = vand.u32 %v1325, 4294901760
    %v1791 = vsub.f32 %v1325, %v1790
    %v1792 = vand.u32 %v1791, 4294901760
    %1793 = vmatpush1.msra.mxu0 %v1792
    %1794 = vmatprep.subr.mxu0 0.0
    %v1795 = vand.u32 %v1326, 4294901760
    %v1796 = vsub.f32 %v1326, %v1795
    %v1797 = vand.u32 %v1796, 4294901760
    %1798 = vmatpush1.msra.mxu0 %v1797
    %1799 = vmatprep.subr.mxu0 0.0
    %v1800 = vand.u32 %v1327, 4294901760
    %v1801 = vsub.f32 %v1327, %v1800
    %v1802 = vand.u32 %v1801, 4294901760
    %1803 = vmatpush1.msra.mxu0 %v1802
    %1804 = vmatprep.subr.mxu0 0.0
    %v1805 = vand.u32 %v1328, 4294901760
    %v1806 = vsub.f32 %v1328, %v1805
    %v1807 = vand.u32 %v1806, 4294901760
    %1808 = vmatpush1.msra.mxu0 %v1807
    %1809 = vmatprep.subr.mxu0 0.0
    %1810 = vmatpush1.msra.mxu0 0.0
    %1811 = vmatprep.subr.mxu0 0.0
    %1812 = vmatpush1.msra.mxu0 0.0
    %1813 = vmatprep.subr.mxu0 0.0
    %1814 = vmatpush1.msra.mxu0 0.0
    %1815 = vmatprep.subr.mxu0 0.0
    %1816 = vmatpush1.msra.mxu0 0.0
    %1817 = vmatprep.subr.mxu0 0.0
    %1818 = vmatpush1.msra.mxu0 0.0
    %1819 = vmatprep.subr.mxu0 0.0
    %1820 = vmatpush1.msra.mxu0 0.0
    %1821 = vmatprep.subr.mxu0 0.0
    %1822 = vmatpush1.msra.mxu0 0.0
    %1823 = vmatprep.subr.mxu0 0.0
    %1824 = vmatpush1.msra.mxu0 0.0
    %1825 = vmatprep.subr.mxu0 0.0
    %1826 = vmatpush1.msra.mxu0 0.0
    %1827 = vmatprep.subr.mxu0 0.0
    %1828 = vmatpush1.msra.mxu0 0.0
    %1829 = vmatprep.subr.mxu0 0.0
    %1830 = vmatpush1.msra.mxu0 0.0
    %1831 = vmatprep.subr.mxu0 0.0
    %1832 = vmatpush1.msra.mxu0 0.0
    %1833 = vmatprep.subr.mxu0 0.0
    %1834 = vmatpush1.msra.mxu0 0.0
    %1835 = vmatprep.subr.mxu0 0.0
    %1836 = vmatpush1.msra.mxu0 0.0
    %1837 = vmatprep.subr.mxu0 0.0
    %1838 = vmatpush1.msra.mxu0 0.0
    %1839 = vmatprep.subr.mxu0 0.0
    %1840 = vmatpush1.msra.mxu0 0.0
    %1841 = vmatprep.subr.mxu0 0.0
    %1842 = vmatpush1.msra.mxu0 0.0
    %1843 = vmatprep.subr.mxu0 0.0
    %1844 = vmatpush1.msra.mxu0 0.0
    %1845 = vmatprep.subr.mxu0 0.0
    %1846 = vmatpush1.msra.mxu0 0.0
    %1847 = vmatprep.subr.mxu0 0.0
    %1848 = vmatpush1.msra.mxu0 0.0
    %1849 = vmatprep.subr.mxu0 0.0
    %1850 = vmatpush1.msra.mxu0 0.0
    %1851 = vmatprep.subr.mxu0 0.0
    %1852 = vmatpush1.msra.mxu0 0.0
    %1853 = vmatprep.subr.mxu0 0.0
    %1854 = vmatpush1.msra.mxu0 0.0
    %1855 = vmatprep.subr.mxu0 0.0
    %1856 = vmatpush1.msra.mxu0 0.0
    %1857 = vmatprep.subr.mxu0 0.0
    %1858 = vmatpush1.msra.mxu0 0.0
    %1859 = vmatprep.subr.mxu0 0.0
    %1860 = vmatpush1.msra.mxu0 0.0
    %1861 = vmatprep.subr.mxu0 0.0
    %1862 = vmatpush1.msra.mxu0 0.0
    %1863 = vmatprep.subr.mxu0 0.0
    %1864 = vmatpush1.msra.mxu0 0.0
    %1865 = vmatprep.mubr.f32.mxu0 0.0
    %v1866 = vand.u32 %v1358, 4294901760
    %1867 = vmatmul.mubr.f32.gmra.mrb[0].mxu0 %v1866
    %v1868 = vpop.f32.mrb[0].mxu0
    %v1869 = vadd.f32 %v1762, %v1868
    %v1870 = vpop.f32.mrb[0].mxu0
    %1871 = vmatprep.mubr.f32.mxu0 0.0
    %v1872 = vand.u32 %v1361, 4294901760
    %1873 = vmatmul.mubr.f32.gmra.mrb[0].mxu0 %v1872
    %v1874 = vpop.f32.mrb[0].mxu0
    %v1875 = vadd.f32 %v1770, %v1874
    %v1876 = vpop.f32.mrb[0].mxu0
    %1877 = vmatprep.mubr.f32.mxu0 0.0
    %v1878 = vand.u32 %v1364, 4294901760
    %1879 = vmatmul.mubr.f32.gmra.mrb[0].mxu0 %v1878
    %v1880 = vpop.f32.mrb[0].mxu0
    %v1881 = vadd.f32 %v1778, %v1880
    %v1882 = vpop.f32.mrb[0].mxu0
    %1883 = vmatprep.mubr.f32.mxu0 0.0
    %v1884 = vand.u32 %v1367, 4294901760
    %1885 = vmatmul.mubr.f32.gmra.mrb[0].mxu0 %v1884
    %v1886 = vpop.f32.mrb[0].mxu0
    %v1887 = vadd.f32 %v1786, %v1886
    %v1888 = vpop.f32.mrb[0].mxu0
    %1889 = vdwg.mxu0
    %1890 = vmatprep.subr.mxu0 0.0
    %v1891 = vand.u32 %v1325, 4294901760
    %1892 = vmatpush1.msra.mxu0 %v1891
    %1893 = vmatprep.subr.mxu0 0.0
    %v1894 = vand.u32 %v1326, 4294901760
    %1895 = vmatpush1.msra.mxu0 %v1894
    %1896 = vmatprep.subr.mxu0 0.0
    %v1897 = vand.u32 %v1327, 4294901760
    %1898 = vmatpush1.msra.mxu0 %v1897
    %1899 = vmatprep.subr.mxu0 0.0
    %v1900 = vand.u32 %v1328, 4294901760
    %1901 = vmatpush1.msra.mxu0 %v1900
    %1902 = vmatprep.subr.mxu0 0.0
    %1903 = vmatpush1.msra.mxu0 0.0
    %1904 = vmatprep.subr.mxu0 0.0
    %1905 = vmatpush1.msra.mxu0 0.0
    %1906 = vmatprep.subr.mxu0 0.0
    %1907 = vmatpush1.msra.mxu0 0.0
    %1908 = vmatprep.subr.mxu0 0.0
    %1909 = vmatpush1.msra.mxu0 0.0
    %1910 = vmatprep.subr.mxu0 0.0
    %1911 = vmatpush1.msra.mxu0 0.0
    %1912 = vmatprep.subr.mxu0 0.0
    %1913 = vmatpush1.msra.mxu0 0.0
    %1914 = vmatprep.subr.mxu0 0.0
    %1915 = vmatpush1.msra.mxu0 0.0
    %1916 = vmatprep.subr.mxu0 0.0
    %1917 = vmatpush1.msra.mxu0 0.0
    %1918 = vmatprep.subr.mxu0 0.0
    %1919 = vmatpush1.msra.mxu0 0.0
    %1920 = vmatprep.subr.mxu0 0.0
    %1921 = vmatpush1.msra.mxu0 0.0
    %1922 = vmatprep.subr.mxu0 0.0
    %1923 = vmatpush1.msra.mxu0 0.0
    %1924 = vmatprep.subr.mxu0 0.0
    %1925 = vmatpush1.msra.mxu0 0.0
    %1926 = vmatprep.subr.mxu0 0.0
    %1927 = vmatpush1.msra.mxu0 0.0
    %1928 = vmatprep.subr.mxu0 0.0
    %1929 = vmatpush1.msra.mxu0 0.0
    %1930 = vmatprep.subr.mxu0 0.0
    %1931 = vmatpush1.msra.mxu0 0.0
    %1932 = vmatprep.subr.mxu0 0.0
    %1933 = vmatpush1.msra.mxu0 0.0
    %1934 = vmatprep.subr.mxu0 0.0
    %1935 = vmatpush1.msra.mxu0 0.0
    %1936 = vmatprep.subr.mxu0 0.0
    %1937 = vmatpush1.msra.mxu0 0.0
    %1938 = vmatprep.subr.mxu0 0.0
    %1939 = vmatpush1.msra.mxu0 0.0
    %1940 = vmatprep.subr.mxu0 0.0
    %1941 = vmatpush1.msra.mxu0 0.0
    %1942 = vmatprep.subr.mxu0 0.0
    %1943 = vmatpush1.msra.mxu0 0.0
    %1944 = vmatprep.subr.mxu0 0.0
    %1945 = vmatpush1.msra.mxu0 0.0
    %1946 = vmatprep.subr.mxu0 0.0
    %1947 = vmatpush1.msra.mxu0 0.0
    %1948 = vmatprep.subr.mxu0 0.0
    %1949 = vmatpush1.msra.mxu0 0.0
    %1950 = vmatprep.subr.mxu0 0.0
    %1951 = vmatpush1.msra.mxu0 0.0
    %1952 = vmatprep.subr.mxu0 0.0
    %1953 = vmatpush1.msra.mxu0 0.0
    %1954 = vmatprep.subr.mxu0 0.0
    %1955 = vmatpush1.msra.mxu0 0.0
    %1956 = vmatprep.subr.mxu0 0.0
    %1957 = vmatpush1.msra.mxu0 0.0
    %1958 = vmatprep.mubr.f32.mxu0 0.0
    %v1959 = vand.u32 %v1358, 4294901760
    %1960 = vmatmul.mubr.f32.gmra.mrb[0].mxu0 %v1959
    %v1961 = vpop.f32.mrb[0].mxu0
    %v1962 = vadd.f32 %v1869, %v1961
    %v1963 = vpop.f32.mrb[0].mxu0
    %1964 = vmatprep.mubr.f32.mxu0 0.0
    %v1965 = vand.u32 %v1361, 4294901760
    %1966 = vmatmul.mubr.f32.gmra.mrb[0].mxu0 %v1965
    %v1967 = vpop.f32.mrb[0].mxu0
    %v1968 = vadd.f32 %v1875, %v1967
    %v1969 = vpop.f32.mrb[0].mxu0
    %1970 = vmatprep.mubr.f32.mxu0 0.0
    %v1971 = vand.u32 %v1364, 4294901760
    %1972 = vmatmul.mubr.f32.gmra.mrb[0].mxu0 %v1971
    %v1973 = vpop.f32.mrb[0].mxu0
    %v1974 = vadd.f32 %v1881, %v1973
    %v1975 = vpop.f32.mrb[0].mxu0
    %1976 = vmatprep.mubr.f32.mxu0 0.0
    %v1977 = vand.u32 %v1367, 4294901760
    %1978 = vmatmul.mubr.f32.gmra.mrb[0].mxu0 %v1977
    %v1979 = vpop.f32.mrb[0].mxu0
    %v1980 = vadd.f32 %v1887, %v1979
    %v1981 = vpop.f32.mrb[0].mxu0
    %1982 = vdwg.mxu0
    %v1983 = vtanh.pop %v1962
    %v1984 = vtanh.pop %v1968
    %v1985 = vtanh.pop %v1974
    %v1986 = vtanh.pop %v1980
    %v1987 = vld [vmem:[%s7] sm:$0xff]
    %v1988 = vld [vmem:[%s7 + $0x8] sm:$0xff]
    %v1989 = vld [vmem:[%s7 + $0x10] sm:$0xff]
    %v1990 = vld [vmem:[%s7 + $0x18] sm:$0xff]
    %1992 = vset.pattern.permute.xlu0 0
    %1993 = vperm.xlu0 %1992, %v1987
    %v1994 = vpop.permute.xlu0 %1993
    %1997 = vset.pattern.permute.xlu0 0
    %1998 = vperm.xlu0 %1997, %v1988
    %v1999 = vpop.permute.xlu0 %1998
    %2002 = vset.pattern.permute.xlu0 0
    %2003 = vperm.xlu0 %2002, %v1989
    %v2004 = vpop.permute.xlu0 %2003
    %2007 = vset.pattern.permute.xlu0 0
    %2008 = vperm.xlu0 %2007, %v1990
    %v2009 = vpop.permute.xlu0 %2008
    %v2011 = vmul.f32 %v1983, %v1994
    %v2012 = vmul.f32 %v1984, %v1999
    %v2013 = vmul.f32 %v1985, %v2004
    %v2014 = vmul.f32 %v1986, %v2009
    %v2015 = vadd.f32 %v2011, %v2012
    %v2016 = vadd.f32 %v2015, %v2013
    %v2017 = vadd.f32 %v2016, %v2014
    %v2018 = vrot.slane %v2017, 4
    %v2019 = vadd.f32 %v2017, %v2018
    %v2020 = vrot.slane %v2019, 2
    %v2021 = vadd.f32 %v2019, %v2020
    %v2022 = vrot.slane %v2021, 1
    %v2023 = vadd.f32 %v2021, %v2022
    %v2024 = vld [vmem:[#allocation2] sm:$0x1]
    %2026 = vset.pattern.permute.xlu0 0
    %2027 = vperm.xlu0 %2026, %v2024
    %v2028 = vpop.permute.xlu0 %2027
    %v2030 = vlaneseq
    %v2031 = vshrl.u32 %v2030, 7
    %v2032 = vsub.s32 0, %v2031
    %v2033 = vrot.slane %v2028, %v2032
    %v2034 = vadd.f32 %v2023, %v2033
    %2035 = vst [vmem:[#allocation3] sm:$0x1] %v2034
    // Predicated region
    $region38: #{tpu_custom_call.1} parent=1 // pred_check
      _
    $region39: #{tpu_custom_call.1} parent=1 // pred_check_branch
      %2037 = sbr.rel (0) target = $region41
    $region40: #{tpu_custom_call.1} parent=1 // pred_region
      %s2039 = ssub.s32 16, 16
      %2040 = vsyncadd [#allocation4], %s2039
      %s2042 = sshll.u32 [#allocation3], 4
      %s2043 = int_to_ptr.vmem [resolvable:$true] %s2042
      %2045 = dma.vmem_to_hbm [thread:$0]  %s2043, 16, %s9, [#allocation4]
    $region41: #{tpu_custom_call.1} parent=1 // pred_fallthru
      _
    // Predicated region
    $region42: #{tpu_custom_call.1} parent=1 // pred_check
      _
    $region43: #{tpu_custom_call.1} parent=1 // pred_check_branch
      %2047 = sbr.rel (0) target = $region45
    $region44: #{tpu_custom_call.1} parent=1 // pred_region
      %2048 = dma.done [#allocation4], 16
    $region45: #{tpu_custom_call.1} parent=1 // pred_fallthru
      _
    %2049 = vsyncpa [#allocation4], 1

</llo_original>
